<compile_context>
chip_gen: v6e
topology: v6e:2x2x1
jax: 0.10.0
libtpu: 0.0.40
codegen_flags: <defaults>
</compile_context>

<pallas_src>
import functools

import jax
import jax.numpy as jnp
from jax.experimental import pallas as pl
from jax.experimental.pallas import tpu as pltpu

HIDDEN = 768


def _round_up(n, m):
    return ((n + m - 1) // m) * m


def _device_kind():
    try:
        return jax.devices()[0].device_kind.lower()
    except Exception:
        return ""


def mc_kernel(x_ref, w1_ref, b1_ref, w2_ref, b2_ref, o_ref, *, bf16_epilogue=True):
    # x arrives f32; cast to bf16 in-kernel (hidden under MXU work).
    x = x_ref[...].astype(jnp.bfloat16)                                 # (TB, 768)
    h = jnp.dot(x, w1_ref[...], preferred_element_type=jnp.float32)     # f32 accumulate
    h = h + b1_ref[...]
    if bf16_epilogue:
        # v6e/v7x: bf16 tanh on the EUP (2x f32 throughput); h is needed in bf16
        # for the second MXU pass anyway.
        h = jnp.tanh(h.astype(jnp.bfloat16))
    else:
        # v5e: no bf16 EUP path -- tanh in f32, then cast.
        h = jnp.tanh(h).astype(jnp.bfloat16)
    logits = jnp.dot(h, w2_ref[...], preferred_element_type=jnp.float32) + b2_ref[...]
    # Numerically-stable softmax over the lane-padded output dim; padded lanes
    # carry a -1e30 bias so exp() underflows to 0 and drops out of the sum.
    m = jnp.max(logits, axis=-1, keepdims=True)
    e = jnp.exp(logits - m)
    denom = jnp.sum(e, axis=-1, keepdims=True)
    o_ref[...] = e / denom        # exact normalization: rows sum to 1 to ~1 ulp


def mc_prepare_params(w1, b1, w2, b2):
    """One-time parameter prep (amortized across forward calls).

    w1: (768, 768)   b1: (768,) or (1,768)
    w2: (768, out)   b2: (out,) or (1,out)
    Weights are stored [in_features, out_features]; kernel computes x @ W + b.
    """
    out_size = int(w2.shape[-1])
    n_pad = _round_up(out_size, 128)                 # lane-dense second GEMM / stores
    w1b = jnp.asarray(w1).astype(jnp.bfloat16)
    b1f = jnp.asarray(b1, jnp.float32).reshape(1, HIDDEN)
    w2b = (jnp.zeros((HIDDEN, n_pad), jnp.bfloat16)
           .at[:, :out_size].set(jnp.asarray(w2).astype(jnp.bfloat16)))
    # Padded bias lanes get a huge negative so softmax ignores them.
    b2f = (jnp.full((1, n_pad), -1e30, jnp.float32)
           .at[:, :out_size].set(jnp.asarray(b2, jnp.float32).reshape(1, out_size)))
    return dict(w1=w1b, b1=b1f, w2=w2b, b2=b2f, out_size=out_size, n_pad=n_pad)


def mc_forward(x, params, *, tile_b=None, bf16_epilogue=None):
    """x: (B, 768) float32 (or bf16); params from mc_prepare_params."""
    B, D = x.shape
    assert D == HIDDEN
    out_size, n_pad = params["out_size"], params["n_pad"]

    kind = _device_kind()
    is_v5e = ("v5 lite" in kind) or ("v5e" in kind) or ("v5litepod" in kind)
    is_v7 = "v7" in kind
    if tile_b is None:
        tile_b = 512 if is_v5e else 1024            # v5e: 16 MiB scoped-VMEM default
    if bf16_epilogue is None:
        bf16_epilogue = not is_v5e                  # v5e has no bf16 VPU/EUP

    b8 = _round_up(B, 8)
    tb = min(tile_b, b8)
    if is_v7 and b8 >= 16:
        # Keep both v7x TensorCores busy: at least 2 grid steps when possible.
        tb = min(tb, _round_up(pl.cdiv(b8, 2), 8))
    B_pad = _round_up(b8, tb)

    # Only pad the batch when required (common case: x goes straight to the kernel).
    xin = x if B_pad == B else jnp.zeros((B_pad, HIDDEN), x.dtype).at[:B].set(x)

    grid = (B_pad // tb,)
    kernel = functools.partial(mc_kernel, bf16_epilogue=bf16_epilogue)

    cost = pl.CostEstimate(
        flops=2 * B_pad * HIDDEN * (HIDDEN + n_pad),
        transcendentals=B_pad * (HIDDEN + n_pad),       # tanh + exp
        bytes_accessed=(int(xin.size) * xin.dtype.itemsize
                        + int(params["w1"].size) * 2 + int(params["w2"].size) * 2
                        + int(params["b1"].size) * 4 + int(params["b2"].size) * 4
                        + B_pad * n_pad * 4),
    )

    out_padded = pl.pallas_call(
        kernel,
        out_shape=jax.ShapeDtypeStruct((B_pad, n_pad), jnp.float32),
        grid_spec=pltpu.PrefetchScalarGridSpec(
            num_scalar_prefetch=0,
            grid=grid,
            in_specs=[
                pl.BlockSpec((tb, HIDDEN), lambda i: (i, 0)),       # x tile (f32)
                pl.BlockSpec((HIDDEN, HIDDEN), lambda i: (0, 0)),   # W1 bf16 (grid-invariant)
                pl.BlockSpec((1, HIDDEN), lambda i: (0, 0)),        # b1 f32
                pl.BlockSpec((HIDDEN, n_pad), lambda i: (0, 0)),    # W2 bf16, lane-padded
                pl.BlockSpec((1, n_pad), lambda i: (0, 0)),         # b2 f32, -1e30 padded
            ],
            out_specs=pl.BlockSpec((tb, n_pad), lambda i: (i, 0)),
        ),
        compiler_params=pltpu.CompilerParams(
            dimension_semantics=("parallel",),
            vmem_limit_bytes=64 << 20,
        ),
        cost_estimate=cost,
    )(xin, params["w1"], params["b1"], params["w2"], params["b2"])

    if B_pad != B or n_pad != out_size:
        return out_padded[:B, :out_size]
    return out_padded


if __name__ == "__main__":
    key = jax.random.PRNGKey(0)
    k_x, k_w1, k_b1, k_w2, k_b2 = jax.random.split(key, 5)

    batch = 8
    output_size = 4

    # Deterministic synthetic params (module: Linear(768,768), Linear(768,out)).
    x = jax.random.normal(k_x, (batch, HIDDEN), dtype=jnp.float32)
    w1 = jax.random.normal(k_w1, (HIDDEN, HIDDEN), dtype=jnp.float32) * 0.02
    b1 = jax.random.normal(k_b1, (HIDDEN,), dtype=jnp.float32) * 0.02
    w2 = jax.random.normal(k_w2, (HIDDEN, output_size), dtype=jnp.float32) * 0.02
    b2 = jax.random.normal(k_b2, (output_size,), dtype=jnp.float32) * 0.02

    params = mc_prepare_params(w1, b1, w2, b2)      # one-time weight prep
    out = jax.block_until_ready(mc_forward(x, params))
    assert out.shape == (batch, output_size)

    # Full-f32 reference of the original module (loose tolerance for bf16 operands).
    ref_f32 = jax.nn.softmax(jnp.tanh(x @ w1 + b1[None, :]) @ w2 + b2[None, :], axis=-1)
    assert jnp.allclose(out, ref_f32, atol=2e-2, rtol=2e-2)

    # Exact softmax normalization: rows sum to 1.
    assert jnp.allclose(jnp.sum(out, axis=-1), 1.0, atol=1e-3)

    print("KERNEL_OK")
</pallas_src>

<mosaic_0001>
module attributes {stable_mosaic.version = 11 : i64} {
  func.func @mc_kernel(%arg0: i32, %arg1: memref<8x768xf32, #tpu.memory_space<vmem>>, %arg2: memref<768x768xbf16, #tpu.memory_space<vmem>>, %arg3: memref<1x768xf32, #tpu.memory_space<vmem>>, %arg4: memref<768x128xbf16, #tpu.memory_space<vmem>>, %arg5: memref<1x128xf32, #tpu.memory_space<vmem>>, %arg6: memref<8x128xf32, #tpu.memory_space<vmem>>) attributes {dimension_semantics = [#tpu.dimension_semantics<parallel>], iteration_bounds = array<i64: 1>, scalar_prefetch = 0 : i64, scratch_operands = 0 : i64, tpu.core_type = #tpu.core_type<tc>, window_params = [{transform_indices = @transform_0, window_bounds = array<i64: 8, 768>}, {pipeline_mode = #tpu.pipeline_mode<synchronous>, transform_indices = @transform_1, window_bounds = array<i64: 768, 768>}, {pipeline_mode = #tpu.pipeline_mode<synchronous>, transform_indices = @transform_2, window_bounds = array<i64: 1, 768>}, {pipeline_mode = #tpu.pipeline_mode<synchronous>, transform_indices = @transform_3, window_bounds = array<i64: 768, 128>}, {pipeline_mode = #tpu.pipeline_mode<synchronous>, transform_indices = @transform_4, window_bounds = array<i64: 1, 128>}, {transform_indices = @transform_5, window_bounds = array<i64: 8, 128>}]} {
    %c0 = arith.constant 0 : index
    %c0_0 = arith.constant 0 : index
    %0 = vector.load %arg1[%c0, %c0_0] : memref<8x768xf32, #tpu.memory_space<vmem>>, vector<8x768xf32>
    %1 = arith.truncf %0 : vector<8x768xf32> to vector<8x768xbf16>
    %c0_1 = arith.constant 0 : index
    %c0_2 = arith.constant 0 : index
    %2 = vector.load %arg2[%c0_1, %c0_2] : memref<768x768xbf16, #tpu.memory_space<vmem>>, vector<768x768xbf16>
    %cst = arith.constant dense<0.000000e+00> : vector<8x768xf32>
    %3 = tpu.matmul %1, %2, %cst {dimension_numbers = #tpu.dot_dimension_numbers<[1], [0], [0], [1], [0, 0, 1, 1], [], []>} : vector<8x768xbf16>, vector<768x768xbf16>, vector<8x768xf32> -> vector<8x768xf32>
    %c0_3 = arith.constant 0 : index
    %c0_4 = arith.constant 0 : index
    %4 = vector.load %arg3[%c0_3, %c0_4] : memref<1x768xf32, #tpu.memory_space<vmem>>, vector<1x768xf32>
    %5 = vector.broadcast %4 : vector<1x768xf32> to vector<8x768xf32>
    %6 = arith.addf %3, %5 : vector<8x768xf32>
    %7 = arith.truncf %6 : vector<8x768xf32> to vector<8x768xbf16>
    %8 = math.tanh %7 : vector<8x768xbf16>
    %c0_5 = arith.constant 0 : index
    %c0_6 = arith.constant 0 : index
    %9 = vector.load %arg4[%c0_5, %c0_6] : memref<768x128xbf16, #tpu.memory_space<vmem>>, vector<768x128xbf16>
    %cst_7 = arith.constant dense<0.000000e+00> : vector<8x128xf32>
    %10 = tpu.matmul %8, %9, %cst_7 {dimension_numbers = #tpu.dot_dimension_numbers<[1], [0], [0], [1], [0, 0, 1, 1], [], []>} : vector<8x768xbf16>, vector<768x128xbf16>, vector<8x128xf32> -> vector<8x128xf32>
    %c0_8 = arith.constant 0 : index
    %c0_9 = arith.constant 0 : index
    %11 = vector.load %arg5[%c0_8, %c0_9] : memref<1x128xf32, #tpu.memory_space<vmem>>, vector<1x128xf32>
    %12 = vector.broadcast %11 : vector<1x128xf32> to vector<8x128xf32>
    %13 = arith.addf %10, %12 : vector<8x128xf32>
    %cst_10 = arith.constant dense<0xFF800000> : vector<8xf32>
    %14 = vector.multi_reduction <maximumf>, %13, %cst_10 [1] : vector<8x128xf32> to vector<8xf32>
    %15 = vector.shape_cast %14 : vector<8xf32> to vector<8x1xf32>
    %16 = vector.broadcast %15 : vector<8x1xf32> to vector<8x128xf32>
    %17 = arith.subf %13, %16 : vector<8x128xf32>
    %18 = math.exp %17 : vector<8x128xf32>
    %cst_11 = arith.constant dense<0.000000e+00> : vector<8xf32>
    %19 = vector.multi_reduction <add>, %18, %cst_11 [1] : vector<8x128xf32> to vector<8xf32>
    %20 = vector.shape_cast %19 : vector<8xf32> to vector<8x1xf32>
    %21 = vector.broadcast %20 : vector<8x1xf32> to vector<8x128xf32>
    %22 = arith.divf %18, %21 : vector<8x128xf32>
    %c0_12 = arith.constant 0 : index
    %c0_13 = arith.constant 0 : index
    %23 = vector.load %arg6[%c0_12, %c0_13] : memref<8x128xf32, #tpu.memory_space<vmem>>, vector<8x128xf32>
    tpu.vector_store %arg6[%c0_12, %c0_13], %22 {strides = array<i32>} : memref<8x128xf32, #tpu.memory_space<vmem>>, vector<8x128xf32>,
    return
  }
  func.func @transform_0(%arg0: i32) -> (i32, i32) {
    %c0_i32 = arith.constant 0 : i32
    %c0_i32_0 = arith.constant 0 : i32
    return %arg0, %c0_i32 : i32, i32
  }
  func.func @transform_1(%arg0: i32) -> (i32, i32) {
    %c0_i32 = arith.constant 0 : i32
    %c0_i32_0 = arith.constant 0 : i32
    %c0_i32_1 = arith.constant 0 : i32
    return %c0_i32, %c0_i32_0 : i32, i32
  }
  func.func @transform_2(%arg0: i32) -> (i32, i32) {
    %c0_i32 = arith.constant 0 : i32
    %c0_i32_0 = arith.constant 0 : i32
    %c0_i32_1 = arith.constant 0 : i32
    return %c0_i32, %c0_i32_0 : i32, i32
  }
  func.func @transform_3(%arg0: i32) -> (i32, i32) {
    %c0_i32 = arith.constant 0 : i32
    %c0_i32_0 = arith.constant 0 : i32
    %c0_i32_1 = arith.constant 0 : i32
    return %c0_i32, %c0_i32_0 : i32, i32
  }
  func.func @transform_4(%arg0: i32) -> (i32, i32) {
    %c0_i32 = arith.constant 0 : i32
    %c0_i32_0 = arith.constant 0 : i32
    %c0_i32_1 = arith.constant 0 : i32
    return %c0_i32, %c0_i32_0 : i32, i32
  }
  func.func @transform_5(%arg0: i32) -> (i32, i32) {
    %c0_i32 = arith.constant 0 : i32
    %c0_i32_0 = arith.constant 0 : i32
    return %arg0, %c0_i32 : i32, i32
  }
}

</mosaic_0001>

<llo_original>
// kernel: tpu_custom_call.1
$region0: #{tpu_custom_call.1}
  #allocation0 [shape = 'u32[]', space=smem, size = 0x4, offset = 0x4, fixed_abs, tag = 'smem constant byte address 0x4 - core index']
  #allocation1 [shape = 'u32[144,128]{1,0:T(1,128)}', space=vmem, size = 0x12000, scoped, tag = 'internal scratch']
  %s0 = inlined_call_operand.hbm [shape: f32[8,768], index: 0, kind: input, shape index: {}]
  %s1 = inlined_call_operand.hbm [shape: bf16[768,768], index: 1, kind: input, shape index: {}]
  %s2 = inlined_call_operand.hbm [shape: f32[1,768], index: 2, kind: input, shape index: {}]
  %s3 = inlined_call_operand.hbm [shape: bf16[768,128], index: 3, kind: input, shape index: {}]
  %s4 = inlined_call_operand.hbm [shape: f32[1,128], index: 4, kind: input, shape index: {}]
  %s5 = inlined_call_operand.hbm [shape: f32[8,128], index: 5, kind: output, shape index: {}]
  %s6 = sld [smem:[#allocation0]]
  $region50: #{tpu_custom_call.1} parent=0
    _
  %s8 = ssub.s32 1, %s6
  %s9 = scalar_select 0, %s8, %s6
  $region1: #{tpu_custom_call.1} parent=0
    #allocation2 [shape = 'u8[24576]{0}', space=vmem, size = 0x6000, scoped, tag = 'input window, operand 0, single buffered']
    #allocation3 [shape = 's32[1]{0}', space=sflag, size = 0x4, scoped, tag = 'scoped memory for tpu_custom_call.1']
    #allocation4 [shape = 's32[1]{0}', space=sflag, size = 0x4, scoped, tag = 'scoped memory for tpu_custom_call.1']
    #allocation5 [shape = 'u8[1179648]{0}', space=vmem, size = 0x120000, scoped, tag = 'input window, operand 1, single buffered']
    #allocation6 [shape = 's32[1]{0}', space=sflag, size = 0x4, scoped, tag = 'scoped memory for tpu_custom_call.1']
    #allocation7 [shape = 'u8[3072]{0}', space=vmem, size = 0xc00, scoped, tag = 'input window, operand 2, single buffered']
    #allocation8 [shape = 'u8[196608]{0}', space=vmem, size = 0x30000, scoped, tag = 'input window, operand 3, single buffered']
    #allocation9 [shape = 's32[1]{0}', space=sflag, size = 0x4, scoped, tag = 'scoped memory for tpu_custom_call.1']
    #allocation10 [shape = 'u8[512]{0}', space=vmem, size = 0x400, scoped, tag = 'input window, operand 4, single buffered']
    #allocation11 [shape = 'u8[4096]{0}', space=vmem, size = 0x1000, scoped, tag = 'output window, operand 0, single buffered']
    %10 = vsyncpa [#allocation3], 0
    %11 = vsyncpa [#allocation6], 0
    %12 = vsyncpa [#allocation9], 0
    %13 = vsyncpa [#allocation4], 0
    // Predicated region
    $region2: #{tpu_custom_call.1} parent=1 // pred_check
      _
    $region3: #{tpu_custom_call.1} parent=1 // pred_check_branch
      %15 = sbr.rel (0) target = $region5
    $region4: #{tpu_custom_call.1} parent=1 // pred_region
      %s17 = ssub.s32 768, 768
      %18 = vsyncadd [#allocation3], %s17
      %s20 = sshll.u32 [#allocation2], 4
      %s21 = int_to_ptr.vmem [resolvable:$true] %s20
      %23 = dma.hbm_to_vmem [thread:$0]  %s0, 768, %s21, [#allocation3]
    $region5: #{tpu_custom_call.1} parent=1 // pred_fallthru
      _
    // Predicated region
    $region6: #{tpu_custom_call.1} parent=1 // pred_check
      _
    $region7: #{tpu_custom_call.1} parent=1 // pred_check_branch
      %25 = sbr.rel (0) target = $region9
    $region8: #{tpu_custom_call.1} parent=1 // pred_region
      %s27 = ssub.s32 36864, 36864
      %28 = vsyncadd [#allocation6], %s27
      %s29 = sshll.u32 [#allocation5], 4
      %s30 = int_to_ptr.vmem [resolvable:$true] %s29
      %35 = dma.hbm_to_vmem [thread:$0]  %s1, 36864, %s30, [#allocation6], 384, 384, 24
    $region9: #{tpu_custom_call.1} parent=1 // pred_fallthru
      _
    // Predicated region
    $region10: #{tpu_custom_call.1} parent=1 // pred_check
      _
    $region11: #{tpu_custom_call.1} parent=1 // pred_check_branch
      %37 = sbr.rel (0) target = $region13
    $region12: #{tpu_custom_call.1} parent=1 // pred_region
      %s39 = ssub.s32 96, 96
      %40 = vsyncadd [#allocation6], %s39
      %s42 = sshll.u32 [#allocation7], 4
      %s43 = int_to_ptr.vmem [resolvable:$true] %s42
      %45 = dma.hbm_to_vmem [thread:$0]  %s2, 96, %s43, [#allocation6]
    $region13: #{tpu_custom_call.1} parent=1 // pred_fallthru
      _
    // Predicated region
    $region14: #{tpu_custom_call.1} parent=1 // pred_check
      _
    $region15: #{tpu_custom_call.1} parent=1 // pred_check_branch
      %47 = sbr.rel (0) target = $region17
    $region16: #{tpu_custom_call.1} parent=1 // pred_region
      %s49 = ssub.s32 6144, 6144
      %50 = vsyncadd [#allocation9], %s49
      %s51 = sshll.u32 [#allocation8], 4
      %s52 = int_to_ptr.vmem [resolvable:$true] %s51
      %57 = dma.hbm_to_vmem [thread:$0]  %s3, 6144, %s52, [#allocation9], 64, 64, 4
    $region17: #{tpu_custom_call.1} parent=1 // pred_fallthru
      _
    // Predicated region
    $region18: #{tpu_custom_call.1} parent=1 // pred_check
      _
    $region19: #{tpu_custom_call.1} parent=1 // pred_check_branch
      %59 = sbr.rel (0) target = $region21
    $region20: #{tpu_custom_call.1} parent=1 // pred_region
      %s61 = ssub.s32 16, 16
      %62 = vsyncadd [#allocation9], %s61
      %s64 = sshll.u32 [#allocation10], 4
      %s65 = int_to_ptr.vmem [resolvable:$true] %s64
      %67 = dma.hbm_to_vmem [thread:$0]  %s4, 16, %s65, [#allocation9]
    $region21: #{tpu_custom_call.1} parent=1 // pred_fallthru
      _
    // Predicated region
    $region22: #{tpu_custom_call.1} parent=1 // pred_check
      _
    $region23: #{tpu_custom_call.1} parent=1 // pred_check_branch
      %69 = sbr.rel (0) target = $region25
    $region24: #{tpu_custom_call.1} parent=1 // pred_region
      %70 = dma.done [#allocation3], 768
    $region25: #{tpu_custom_call.1} parent=1 // pred_fallthru
      _
    // Predicated region
    $region26: #{tpu_custom_call.1} parent=1 // pred_check
      _
    $region27: #{tpu_custom_call.1} parent=1 // pred_check_branch
      %72 = sbr.rel (0) target = $region29
    $region28: #{tpu_custom_call.1} parent=1 // pred_region
      %73 = dma.done [#allocation6], 36864
    $region29: #{tpu_custom_call.1} parent=1 // pred_fallthru
      _
    // Predicated region
    $region30: #{tpu_custom_call.1} parent=1 // pred_check
      _
    $region31: #{tpu_custom_call.1} parent=1 // pred_check_branch
      %75 = sbr.rel (0) target = $region33
    $region32: #{tpu_custom_call.1} parent=1 // pred_region
      %76 = dma.done [#allocation6], 96
    $region33: #{tpu_custom_call.1} parent=1 // pred_fallthru
      _
    // Predicated region
    $region34: #{tpu_custom_call.1} parent=1 // pred_check
      _
    $region35: #{tpu_custom_call.1} parent=1 // pred_check_branch
      %78 = sbr.rel (0) target = $region37
    $region36: #{tpu_custom_call.1} parent=1 // pred_region
      %79 = dma.done [#allocation9], 6144
    $region37: #{tpu_custom_call.1} parent=1 // pred_fallthru
      _
    // Predicated region
    $region38: #{tpu_custom_call.1} parent=1 // pred_check
      _
    $region39: #{tpu_custom_call.1} parent=1 // pred_check_branch
      %81 = sbr.rel (0) target = $region41
    $region40: #{tpu_custom_call.1} parent=1 // pred_region
      %82 = dma.done [#allocation9], 16
    $region41: #{tpu_custom_call.1} parent=1 // pred_fallthru
      _
    %v84 = vld [vmem:[#allocation2] sm:$0xff]
    %v85 = vld [vmem:[#allocation2 + $0x8] sm:$0xff]
    %v86 = vld [vmem:[#allocation2 + $0x10] sm:$0xff]
    %v87 = vld [vmem:[#allocation2 + $0x18] sm:$0xff]
    %v88 = vld [vmem:[#allocation2 + $0x20] sm:$0xff]
    %v89 = vld [vmem:[#allocation2 + $0x28] sm:$0xff]
    %v90 = vpack.c.bf16 %v84, %v84
    %v91 = vpack.c.bf16 %v85, %v85
    %v92 = vpack.c.bf16 %v86, %v86
    %v93 = vpack.c.bf16 %v87, %v87
    %v94 = vpack.c.bf16 %v88, %v88
    %v95 = vpack.c.bf16 %v89, %v89
    %v96 = vld [vmem:[#allocation5] sm:$0xff]
    %v97 = vld [vmem:[#allocation5 + $0x8] sm:$0xff]
    %v98 = vld [vmem:[#allocation5 + $0x10] sm:$0xff]
    %v99 = vld [vmem:[#allocation5 + $0x18] sm:$0xff]
    %v100 = vld [vmem:[#allocation5 + $0x20] sm:$0xff]
    %v101 = vld [vmem:[#allocation5 + $0x28] sm:$0xff]
    %v102 = vld [vmem:[#allocation5 + $0x30] sm:$0xff]
    %v103 = vld [vmem:[#allocation5 + $0x38] sm:$0xff]
    %v104 = vld [vmem:[#allocation5 + $0x40] sm:$0xff]
    %v105 = vld [vmem:[#allocation5 + $0x48] sm:$0xff]
    %v106 = vld [vmem:[#allocation5 + $0x50] sm:$0xff]
    %v107 = vld [vmem:[#allocation5 + $0x58] sm:$0xff]
    %v108 = vld [vmem:[#allocation5 + $0x60] sm:$0xff]
    %v109 = vld [vmem:[#allocation5 + $0x68] sm:$0xff]
    %v110 = vld [vmem:[#allocation5 + $0x70] sm:$0xff]
    %v111 = vld [vmem:[#allocation5 + $0x78] sm:$0xff]
    %v112 = vld [vmem:[#allocation5 + $0x80] sm:$0xff]
    %v113 = vld [vmem:[#allocation5 + $0x88] sm:$0xff]
    %v114 = vld [vmem:[#allocation5 + $0x90] sm:$0xff]
    %v115 = vld [vmem:[#allocation5 + $0x98] sm:$0xff]
    %v116 = vld [vmem:[#allocation5 + $0xa0] sm:$0xff]
    %v117 = vld [vmem:[#allocation5 + $0xa8] sm:$0xff]
    %v118 = vld [vmem:[#allocation5 + $0xb0] sm:$0xff]
    %v119 = vld [vmem:[#allocation5 + $0xb8] sm:$0xff]
    %v120 = vld [vmem:[#allocation5 + $0xc0] sm:$0xff]
    %v121 = vld [vmem:[#allocation5 + $0xc8] sm:$0xff]
    %v122 = vld [vmem:[#allocation5 + $0xd0] sm:$0xff]
    %v123 = vld [vmem:[#allocation5 + $0xd8] sm:$0xff]
    %v124 = vld [vmem:[#allocation5 + $0xe0] sm:$0xff]
    %v125 = vld [vmem:[#allocation5 + $0xe8] sm:$0xff]
    %v126 = vld [vmem:[#allocation5 + $0xf0] sm:$0xff]
    %v127 = vld [vmem:[#allocation5 + $0xf8] sm:$0xff]
    %v128 = vld [vmem:[#allocation5 + $0x100] sm:$0xff]
    %v129 = vld [vmem:[#allocation5 + $0x108] sm:$0xff]
    %v130 = vld [vmem:[#allocation5 + $0x110] sm:$0xff]
    %v131 = vld [vmem:[#allocation5 + $0x118] sm:$0xff]
    %v132 = vld [vmem:[#allocation5 + $0x120] sm:$0xff]
    %v133 = vld [vmem:[#allocation5 + $0x128] sm:$0xff]
    %v134 = vld [vmem:[#allocation5 + $0x130] sm:$0xff]
    %v135 = vld [vmem:[#allocation5 + $0x138] sm:$0xff]
    %v136 = vld [vmem:[#allocation5 + $0x140] sm:$0xff]
    %v137 = vld [vmem:[#allocation5 + $0x148] sm:$0xff]
    %v138 = vld [vmem:[#allocation5 + $0x150] sm:$0xff]
    %v139 = vld [vmem:[#allocation5 + $0x158] sm:$0xff]
    %v140 = vld [vmem:[#allocation5 + $0x160] sm:$0xff]
    %v141 = vld [vmem:[#allocation5 + $0x168] sm:$0xff]
    %v142 = vld [vmem:[#allocation5 + $0x170] sm:$0xff]
    %v143 = vld [vmem:[#allocation5 + $0x178] sm:$0xff]
    %v144 = vld [vmem:[#allocation5 + $0x180] sm:$0xff]
    %v145 = vld [vmem:[#allocation5 + $0x188] sm:$0xff]
    %v146 = vld [vmem:[#allocation5 + $0x190] sm:$0xff]
    %v147 = vld [vmem:[#allocation5 + $0x198] sm:$0xff]
    %v148 = vld [vmem:[#allocation5 + $0x1a0] sm:$0xff]
    %v149 = vld [vmem:[#allocation5 + $0x1a8] sm:$0xff]
    %v150 = vld [vmem:[#allocation5 + $0x1b0] sm:$0xff]
    %v151 = vld [vmem:[#allocation5 + $0x1b8] sm:$0xff]
    %v152 = vld [vmem:[#allocation5 + $0x1c0] sm:$0xff]
    %v153 = vld [vmem:[#allocation5 + $0x1c8] sm:$0xff]
    %v154 = vld [vmem:[#allocation5 + $0x1d0] sm:$0xff]
    %v155 = vld [vmem:[#allocation5 + $0x1d8] sm:$0xff]
    %v156 = vld [vmem:[#allocation5 + $0x1e0] sm:$0xff]
    %v157 = vld [vmem:[#allocation5 + $0x1e8] sm:$0xff]
    %v158 = vld [vmem:[#allocation5 + $0x1f0] sm:$0xff]
    %v159 = vld [vmem:[#allocation5 + $0x1f8] sm:$0xff]
    %v160 = vld [vmem:[#allocation5 + $0x200] sm:$0xff]
    %v161 = vld [vmem:[#allocation5 + $0x208] sm:$0xff]
    %v162 = vld [vmem:[#allocation5 + $0x210] sm:$0xff]
    %v163 = vld [vmem:[#allocation5 + $0x218] sm:$0xff]
    %v164 = vld [vmem:[#allocation5 + $0x220] sm:$0xff]
    %v165 = vld [vmem:[#allocation5 + $0x228] sm:$0xff]
    %v166 = vld [vmem:[#allocation5 + $0x230] sm:$0xff]
    %v167 = vld [vmem:[#allocation5 + $0x238] sm:$0xff]
    %v168 = vld [vmem:[#allocation5 + $0x240] sm:$0xff]
    %v169 = vld [vmem:[#allocation5 + $0x248] sm:$0xff]
    %v170 = vld [vmem:[#allocation5 + $0x250] sm:$0xff]
    %v171 = vld [vmem:[#allocation5 + $0x258] sm:$0xff]
    %v172 = vld [vmem:[#allocation5 + $0x260] sm:$0xff]
    %v173 = vld [vmem:[#allocation5 + $0x268] sm:$0xff]
    %v174 = vld [vmem:[#allocation5 + $0x270] sm:$0xff]
    %v175 = vld [vmem:[#allocation5 + $0x278] sm:$0xff]
    %v176 = vld [vmem:[#allocation5 + $0x280] sm:$0xff]
    %v177 = vld [vmem:[#allocation5 + $0x288] sm:$0xff]
    %v178 = vld [vmem:[#allocation5 + $0x290] sm:$0xff]
    %v179 = vld [vmem:[#allocation5 + $0x298] sm:$0xff]
    %v180 = vld [vmem:[#allocation5 + $0x2a0] sm:$0xff]
    %v181 = vld [vmem:[#allocation5 + $0x2a8] sm:$0xff]
    %v182 = vld [vmem:[#allocation5 + $0x2b0] sm:$0xff]
    %v183 = vld [vmem:[#allocation5 + $0x2b8] sm:$0xff]
    %v184 = vld [vmem:[#allocation5 + $0x2c0] sm:$0xff]
    %v185 = vld [vmem:[#allocation5 + $0x2c8] sm:$0xff]
    %v186 = vld [vmem:[#allocation5 + $0x2d0] sm:$0xff]
    %v187 = vld [vmem:[#allocation5 + $0x2d8] sm:$0xff]
    %v188 = vld [vmem:[#allocation5 + $0x2e0] sm:$0xff]
    %v189 = vld [vmem:[#allocation5 + $0x2e8] sm:$0xff]
    %v190 = vld [vmem:[#allocation5 + $0x2f0] sm:$0xff]
    %v191 = vld [vmem:[#allocation5 + $0x2f8] sm:$0xff]
    %v192 = vld [vmem:[#allocation5 + $0x300] sm:$0xff]
    %v193 = vld [vmem:[#allocation5 + $0x308] sm:$0xff]
    %v194 = vld [vmem:[#allocation5 + $0x310] sm:$0xff]
    %v195 = vld [vmem:[#allocation5 + $0x318] sm:$0xff]
    %v196 = vld [vmem:[#allocation5 + $0x320] sm:$0xff]
    %v197 = vld [vmem:[#allocation5 + $0x328] sm:$0xff]
    %v198 = vld [vmem:[#allocation5 + $0x330] sm:$0xff]
    %v199 = vld [vmem:[#allocation5 + $0x338] sm:$0xff]
    %v200 = vld [vmem:[#allocation5 + $0x340] sm:$0xff]
    %v201 = vld [vmem:[#allocation5 + $0x348] sm:$0xff]
    %v202 = vld [vmem:[#allocation5 + $0x350] sm:$0xff]
    %v203 = vld [vmem:[#allocation5 + $0x358] sm:$0xff]
    %v204 = vld [vmem:[#allocation5 + $0x360] sm:$0xff]
    %v205 = vld [vmem:[#allocation5 + $0x368] sm:$0xff]
    %v206 = vld [vmem:[#allocation5 + $0x370] sm:$0xff]
    %v207 = vld [vmem:[#allocation5 + $0x378] sm:$0xff]
    %v208 = vld [vmem:[#allocation5 + $0x380] sm:$0xff]
    %v209 = vld [vmem:[#allocation5 + $0x388] sm:$0xff]
    %v210 = vld [vmem:[#allocation5 + $0x390] sm:$0xff]
    %v211 = vld [vmem:[#allocation5 + $0x398] sm:$0xff]
    %v212 = vld [vmem:[#allocation5 + $0x3a0] sm:$0xff]
    %v213 = vld [vmem:[#allocation5 + $0x3a8] sm:$0xff]
    %v214 = vld [vmem:[#allocation5 + $0x3b0] sm:$0xff]
    %v215 = vld [vmem:[#allocation5 + $0x3b8] sm:$0xff]
    %v216 = vld [vmem:[#allocation5 + $0x3c0] sm:$0xff]
    %v217 = vld [vmem:[#allocation5 + $0x3c8] sm:$0xff]
    %v218 = vld [vmem:[#allocation5 + $0x3d0] sm:$0xff]
    %v219 = vld [vmem:[#allocation5 + $0x3d8] sm:$0xff]
    %v220 = vld [vmem:[#allocation5 + $0x3e0] sm:$0xff]
    %v221 = vld [vmem:[#allocation5 + $0x3e8] sm:$0xff]
    %v222 = vld [vmem:[#allocation5 + $0x3f0] sm:$0xff]
    %v223 = vld [vmem:[#allocation5 + $0x3f8] sm:$0xff]
    %v224 = vld [vmem:[#allocation5 + $0x400] sm:$0xff]
    %v225 = vld [vmem:[#allocation5 + $0x408] sm:$0xff]
    %v226 = vld [vmem:[#allocation5 + $0x410] sm:$0xff]
    %v227 = vld [vmem:[#allocation5 + $0x418] sm:$0xff]
    %v228 = vld [vmem:[#allocation5 + $0x420] sm:$0xff]
    %v229 = vld [vmem:[#allocation5 + $0x428] sm:$0xff]
    %v230 = vld [vmem:[#allocation5 + $0x430] sm:$0xff]
    %v231 = vld [vmem:[#allocation5 + $0x438] sm:$0xff]
    %v232 = vld [vmem:[#allocation5 + $0x440] sm:$0xff]
    %v233 = vld [vmem:[#allocation5 + $0x448] sm:$0xff]
    %v234 = vld [vmem:[#allocation5 + $0x450] sm:$0xff]
    %v235 = vld [vmem:[#allocation5 + $0x458] sm:$0xff]
    %v236 = vld [vmem:[#allocation5 + $0x460] sm:$0xff]
    %v237 = vld [vmem:[#allocation5 + $0x468] sm:$0xff]
    %v238 = vld [vmem:[#allocation5 + $0x470] sm:$0xff]
    %v239 = vld [vmem:[#allocation5 + $0x478] sm:$0xff]
    %v240 = vld [vmem:[#allocation5 + $0x480] sm:$0xff]
    %v241 = vld [vmem:[#allocation5 + $0x488] sm:$0xff]
    %v242 = vld [vmem:[#allocation5 + $0x490] sm:$0xff]
    %v243 = vld [vmem:[#allocation5 + $0x498] sm:$0xff]
    %v244 = vld [vmem:[#allocation5 + $0x4a0] sm:$0xff]
    %v245 = vld [vmem:[#allocation5 + $0x4a8] sm:$0xff]
    %v246 = vld [vmem:[#allocation5 + $0x4b0] sm:$0xff]
    %v247 = vld [vmem:[#allocation5 + $0x4b8] sm:$0xff]
    %v248 = vld [vmem:[#allocation5 + $0x4c0] sm:$0xff]
    %v249 = vld [vmem:[#allocation5 + $0x4c8] sm:$0xff]
    %v250 = vld [vmem:[#allocation5 + $0x4d0] sm:$0xff]
    %v251 = vld [vmem:[#allocation5 + $0x4d8] sm:$0xff]
    %v252 = vld [vmem:[#allocation5 + $0x4e0] sm:$0xff]
    %v253 = vld [vmem:[#allocation5 + $0x4e8] sm:$0xff]
    %v254 = vld [vmem:[#allocation5 + $0x4f0] sm:$0xff]
    %v255 = vld [vmem:[#allocation5 + $0x4f8] sm:$0xff]
    %v256 = vld [vmem:[#allocation5 + $0x500] sm:$0xff]
    %v257 = vld [vmem:[#allocation5 + $0x508] sm:$0xff]
    %v258 = vld [vmem:[#allocation5 + $0x510] sm:$0xff]
    %v259 = vld [vmem:[#allocation5 + $0x518] sm:$0xff]
    %v260 = vld [vmem:[#allocation5 + $0x520] sm:$0xff]
    %v261 = vld [vmem:[#allocation5 + $0x528] sm:$0xff]
    %v262 = vld [vmem:[#allocation5 + $0x530] sm:$0xff]
    %v263 = vld [vmem:[#allocation5 + $0x538] sm:$0xff]
    %v264 = vld [vmem:[#allocation5 + $0x540] sm:$0xff]
    %v265 = vld [vmem:[#allocation5 + $0x548] sm:$0xff]
    %v266 = vld [vmem:[#allocation5 + $0x550] sm:$0xff]
    %v267 = vld [vmem:[#allocation5 + $0x558] sm:$0xff]
    %v268 = vld [vmem:[#allocation5 + $0x560] sm:$0xff]
    %v269 = vld [vmem:[#allocation5 + $0x568] sm:$0xff]
    %v270 = vld [vmem:[#allocation5 + $0x570] sm:$0xff]
    %v271 = vld [vmem:[#allocation5 + $0x578] sm:$0xff]
    %v272 = vld [vmem:[#allocation5 + $0x580] sm:$0xff]
    %v273 = vld [vmem:[#allocation5 + $0x588] sm:$0xff]
    %v274 = vld [vmem:[#allocation5 + $0x590] sm:$0xff]
    %v275 = vld [vmem:[#allocation5 + $0x598] sm:$0xff]
    %v276 = vld [vmem:[#allocation5 + $0x5a0] sm:$0xff]
    %v277 = vld [vmem:[#allocation5 + $0x5a8] sm:$0xff]
    %v278 = vld [vmem:[#allocation5 + $0x5b0] sm:$0xff]
    %v279 = vld [vmem:[#allocation5 + $0x5b8] sm:$0xff]
    %v280 = vld [vmem:[#allocation5 + $0x5c0] sm:$0xff]
    %v281 = vld [vmem:[#allocation5 + $0x5c8] sm:$0xff]
    %v282 = vld [vmem:[#allocation5 + $0x5d0] sm:$0xff]
    %v283 = vld [vmem:[#allocation5 + $0x5d8] sm:$0xff]
    %v284 = vld [vmem:[#allocation5 + $0x5e0] sm:$0xff]
    %v285 = vld [vmem:[#allocation5 + $0x5e8] sm:$0xff]
    %v286 = vld [vmem:[#allocation5 + $0x5f0] sm:$0xff]
    %v287 = vld [vmem:[#allocation5 + $0x5f8] sm:$0xff]
    %v288 = vld [vmem:[#allocation5 + $0x600] sm:$0xff]
    %v289 = vld [vmem:[#allocation5 + $0x608] sm:$0xff]
    %v290 = vld [vmem:[#allocation5 + $0x610] sm:$0xff]
    %v291 = vld [vmem:[#allocation5 + $0x618] sm:$0xff]
    %v292 = vld [vmem:[#allocation5 + $0x620] sm:$0xff]
    %v293 = vld [vmem:[#allocation5 + $0x628] sm:$0xff]
    %v294 = vld [vmem:[#allocation5 + $0x630] sm:$0xff]
    %v295 = vld [vmem:[#allocation5 + $0x638] sm:$0xff]
    %v296 = vld [vmem:[#allocation5 + $0x640] sm:$0xff]
    %v297 = vld [vmem:[#allocation5 + $0x648] sm:$0xff]
    %v298 = vld [vmem:[#allocation5 + $0x650] sm:$0xff]
    %v299 = vld [vmem:[#allocation5 + $0x658] sm:$0xff]
    %v300 = vld [vmem:[#allocation5 + $0x660] sm:$0xff]
    %v301 = vld [vmem:[#allocation5 + $0x668] sm:$0xff]
    %v302 = vld [vmem:[#allocation5 + $0x670] sm:$0xff]
    %v303 = vld [vmem:[#allocation5 + $0x678] sm:$0xff]
    %v304 = vld [vmem:[#allocation5 + $0x680] sm:$0xff]
    %v305 = vld [vmem:[#allocation5 + $0x688] sm:$0xff]
    %v306 = vld [vmem:[#allocation5 + $0x690] sm:$0xff]
    %v307 = vld [vmem:[#allocation5 + $0x698] sm:$0xff]
    %v308 = vld [vmem:[#allocation5 + $0x6a0] sm:$0xff]
    %v309 = vld [vmem:[#allocation5 + $0x6a8] sm:$0xff]
    %v310 = vld [vmem:[#allocation5 + $0x6b0] sm:$0xff]
    %v311 = vld [vmem:[#allocation5 + $0x6b8] sm:$0xff]
    %v312 = vld [vmem:[#allocation5 + $0x6c0] sm:$0xff]
    %v313 = vld [vmem:[#allocation5 + $0x6c8] sm:$0xff]
    %v314 = vld [vmem:[#allocation5 + $0x6d0] sm:$0xff]
    %v315 = vld [vmem:[#allocation5 + $0x6d8] sm:$0xff]
    %v316 = vld [vmem:[#allocation5 + $0x6e0] sm:$0xff]
    %v317 = vld [vmem:[#allocation5 + $0x6e8] sm:$0xff]
    %v318 = vld [vmem:[#allocation5 + $0x6f0] sm:$0xff]
    %v319 = vld [vmem:[#allocation5 + $0x6f8] sm:$0xff]
    %v320 = vld [vmem:[#allocation5 + $0x700] sm:$0xff]
    %v321 = vld [vmem:[#allocation5 + $0x708] sm:$0xff]
    %v322 = vld [vmem:[#allocation5 + $0x710] sm:$0xff]
    %v323 = vld [vmem:[#allocation5 + $0x718] sm:$0xff]
    %v324 = vld [vmem:[#allocation5 + $0x720] sm:$0xff]
    %v325 = vld [vmem:[#allocation5 + $0x728] sm:$0xff]
    %v326 = vld [vmem:[#allocation5 + $0x730] sm:$0xff]
    %v327 = vld [vmem:[#allocation5 + $0x738] sm:$0xff]
    %v328 = vld [vmem:[#allocation5 + $0x740] sm:$0xff]
    %v329 = vld [vmem:[#allocation5 + $0x748] sm:$0xff]
    %v330 = vld [vmem:[#allocation5 + $0x750] sm:$0xff]
    %v331 = vld [vmem:[#allocation5 + $0x758] sm:$0xff]
    %v332 = vld [vmem:[#allocation5 + $0x760] sm:$0xff]
    %v333 = vld [vmem:[#allocation5 + $0x768] sm:$0xff]
    %v334 = vld [vmem:[#allocation5 + $0x770] sm:$0xff]
    %v335 = vld [vmem:[#allocation5 + $0x778] sm:$0xff]
    %v336 = vld [vmem:[#allocation5 + $0x780] sm:$0xff]
    %v337 = vld [vmem:[#allocation5 + $0x788] sm:$0xff]
    %v338 = vld [vmem:[#allocation5 + $0x790] sm:$0xff]
    %v339 = vld [vmem:[#allocation5 + $0x798] sm:$0xff]
    %v340 = vld [vmem:[#allocation5 + $0x7a0] sm:$0xff]
    %v341 = vld [vmem:[#allocation5 + $0x7a8] sm:$0xff]
    %v342 = vld [vmem:[#allocation5 + $0x7b0] sm:$0xff]
    %v343 = vld [vmem:[#allocation5 + $0x7b8] sm:$0xff]
    %v344 = vld [vmem:[#allocation5 + $0x7c0] sm:$0xff]
    %v345 = vld [vmem:[#allocation5 + $0x7c8] sm:$0xff]
    %v346 = vld [vmem:[#allocation5 + $0x7d0] sm:$0xff]
    %v347 = vld [vmem:[#allocation5 + $0x7d8] sm:$0xff]
    %v348 = vld [vmem:[#allocation5 + $0x7e0] sm:$0xff]
    %v349 = vld [vmem:[#allocation5 + $0x7e8] sm:$0xff]
    %v350 = vld [vmem:[#allocation5 + $0x7f0] sm:$0xff]
    %v351 = vld [vmem:[#allocation5 + $0x7f8] sm:$0xff]
    %v352 = vld [vmem:[#allocation5 + $0x800] sm:$0xff]
    %v353 = vld [vmem:[#allocation5 + $0x808] sm:$0xff]
    %v354 = vld [vmem:[#allocation5 + $0x810] sm:$0xff]
    %v355 = vld [vmem:[#allocation5 + $0x818] sm:$0xff]
    %v356 = vld [vmem:[#allocation5 + $0x820] sm:$0xff]
    %v357 = vld [vmem:[#allocation5 + $0x828] sm:$0xff]
    %v358 = vld [vmem:[#allocation5 + $0x830] sm:$0xff]
    %v359 = vld [vmem:[#allocation5 + $0x838] sm:$0xff]
    %v360 = vld [vmem:[#allocation5 + $0x840] sm:$0xff]
    %v361 = vld [vmem:[#allocation5 + $0x848] sm:$0xff]
    %v362 = vld [vmem:[#allocation5 + $0x850] sm:$0xff]
    %v363 = vld [vmem:[#allocation5 + $0x858] sm:$0xff]
    %v364 = vld [vmem:[#allocation5 + $0x860] sm:$0xff]
    %v365 = vld [vmem:[#allocation5 + $0x868] sm:$0xff]
    %v366 = vld [vmem:[#allocation5 + $0x870] sm:$0xff]
    %v367 = vld [vmem:[#allocation5 + $0x878] sm:$0xff]
    %v368 = vld [vmem:[#allocation5 + $0x880] sm:$0xff]
    %v369 = vld [vmem:[#allocation5 + $0x888] sm:$0xff]
    %v370 = vld [vmem:[#allocation5 + $0x890] sm:$0xff]
    %v371 = vld [vmem:[#allocation5 + $0x898] sm:$0xff]
    %v372 = vld [vmem:[#allocation5 + $0x8a0] sm:$0xff]
    %v373 = vld [vmem:[#allocation5 + $0x8a8] sm:$0xff]
    %v374 = vld [vmem:[#allocation5 + $0x8b0] sm:$0xff]
    %v375 = vld [vmem:[#allocation5 + $0x8b8] sm:$0xff]
    %v376 = vld [vmem:[#allocation5 + $0x8c0] sm:$0xff]
    %v377 = vld [vmem:[#allocation5 + $0x8c8] sm:$0xff]
    %v378 = vld [vmem:[#allocation5 + $0x8d0] sm:$0xff]
    %v379 = vld [vmem:[#allocation5 + $0x8d8] sm:$0xff]
    %v380 = vld [vmem:[#allocation5 + $0x8e0] sm:$0xff]
    %v381 = vld [vmem:[#allocation5 + $0x8e8] sm:$0xff]
    %v382 = vld [vmem:[#allocation5 + $0x8f0] sm:$0xff]
    %v383 = vld [vmem:[#allocation5 + $0x8f8] sm:$0xff]
    %v384 = vld [vmem:[#allocation7] sm:$0x3f]
    %v386 = vlaneseq
    %v387 = vshrl.u32 %v386, 7
    %v388 = vsub.s32 0, %v387
    %v389 = vrot.slane %v384, %v388
    %v390 = vlaneseq
    %v391 = vshrl.u32 %v390, 7
    %v392 = vsub.s32 1, %v391
    %v393 = vrot.slane %v384, %v392
    %v394 = vlaneseq
    %v395 = vshrl.u32 %v394, 7
    %v396 = vsub.s32 2, %v395
    %v397 = vrot.slane %v384, %v396
    %v398 = vlaneseq
    %v399 = vshrl.u32 %v398, 7
    %v400 = vsub.s32 3, %v399
    %v401 = vrot.slane %v384, %v400
    %v402 = vlaneseq
    %v403 = vshrl.u32 %v402, 7
    %v404 = vsub.s32 4, %v403
    %v405 = vrot.slane %v384, %v404
    %v406 = vlaneseq
    %v407 = vshrl.u32 %v406, 7
    %v408 = vsub.s32 5, %v407
    %v409 = vrot.slane %v384, %v408
    %v704 = vunpack.c.l.b16 %v96
    %v705 = vunpack.c.h.b16 %v96
    %v706 = vunpack.c.l.b16 %v97
    %v707 = vunpack.c.h.b16 %v97
    %v708 = vunpack.c.l.b16 %v98
    %v709 = vunpack.c.h.b16 %v98
    %v710 = vunpack.c.l.b16 %v99
    %v711 = vunpack.c.h.b16 %v99
    %v712 = vunpack.c.l.b16 %v100
    %v713 = vunpack.c.h.b16 %v100
    %v714 = vunpack.c.l.b16 %v101
    %v715 = vunpack.c.h.b16 %v101
    %v716 = vunpack.c.l.b16 %v102
    %v717 = vunpack.c.h.b16 %v102
    %v718 = vunpack.c.l.b16 %v103
    %v719 = vunpack.c.h.b16 %v103
    %v720 = vunpack.c.l.b16 %v104
    %v721 = vunpack.c.h.b16 %v104
    %v722 = vunpack.c.l.b16 %v105
    %v723 = vunpack.c.h.b16 %v105
    %v724 = vunpack.c.l.b16 %v106
    %v725 = vunpack.c.h.b16 %v106
    %v726 = vunpack.c.l.b16 %v107
    %v727 = vunpack.c.h.b16 %v107
    %v728 = vunpack.c.l.b16 %v108
    %v729 = vunpack.c.h.b16 %v108
    %v730 = vunpack.c.l.b16 %v109
    %v731 = vunpack.c.h.b16 %v109
    %v732 = vunpack.c.l.b16 %v110
    %v733 = vunpack.c.h.b16 %v110
    %v734 = vunpack.c.l.b16 %v111
    %v735 = vunpack.c.h.b16 %v111
    %v736 = vunpack.c.l.b16 %v112
    %v737 = vunpack.c.h.b16 %v112
    %v738 = vunpack.c.l.b16 %v113
    %v739 = vunpack.c.h.b16 %v113
    %v740 = vunpack.c.l.b16 %v114
    %v741 = vunpack.c.h.b16 %v114
    %v742 = vunpack.c.l.b16 %v115
    %v743 = vunpack.c.h.b16 %v115
    %v744 = vunpack.c.l.b16 %v116
    %v745 = vunpack.c.h.b16 %v116
    %v746 = vunpack.c.l.b16 %v117
    %v747 = vunpack.c.h.b16 %v117
    %v748 = vunpack.c.l.b16 %v118
    %v749 = vunpack.c.h.b16 %v118
    %v750 = vunpack.c.l.b16 %v119
    %v751 = vunpack.c.h.b16 %v119
    %v752 = vunpack.c.l.b16 %v120
    %v753 = vunpack.c.h.b16 %v120
    %v754 = vunpack.c.l.b16 %v121
    %v755 = vunpack.c.h.b16 %v121
    %v756 = vunpack.c.l.b16 %v122
    %v757 = vunpack.c.h.b16 %v122
    %v758 = vunpack.c.l.b16 %v123
    %v759 = vunpack.c.h.b16 %v123
    %v760 = vunpack.c.l.b16 %v124
    %v761 = vunpack.c.h.b16 %v124
    %v762 = vunpack.c.l.b16 %v125
    %v763 = vunpack.c.h.b16 %v125
    %v764 = vunpack.c.l.b16 %v126
    %v765 = vunpack.c.h.b16 %v126
    %v766 = vunpack.c.l.b16 %v127
    %v767 = vunpack.c.h.b16 %v127
    %v768 = vunpack.c.l.b16 %v128
    %v769 = vunpack.c.h.b16 %v128
    %v770 = vunpack.c.l.b16 %v129
    %v771 = vunpack.c.h.b16 %v129
    %v772 = vunpack.c.l.b16 %v130
    %v773 = vunpack.c.h.b16 %v130
    %v774 = vunpack.c.l.b16 %v131
    %v775 = vunpack.c.h.b16 %v131
    %v776 = vunpack.c.l.b16 %v132
    %v777 = vunpack.c.h.b16 %v132
    %v778 = vunpack.c.l.b16 %v133
    %v779 = vunpack.c.h.b16 %v133
    %v780 = vunpack.c.l.b16 %v134
    %v781 = vunpack.c.h.b16 %v134
    %v782 = vunpack.c.l.b16 %v135
    %v783 = vunpack.c.h.b16 %v135
    %v784 = vunpack.c.l.b16 %v136
    %v785 = vunpack.c.h.b16 %v136
    %v786 = vunpack.c.l.b16 %v137
    %v787 = vunpack.c.h.b16 %v137
    %v788 = vunpack.c.l.b16 %v138
    %v789 = vunpack.c.h.b16 %v138
    %v790 = vunpack.c.l.b16 %v139
    %v791 = vunpack.c.h.b16 %v139
    %v792 = vunpack.c.l.b16 %v140
    %v793 = vunpack.c.h.b16 %v140
    %v794 = vunpack.c.l.b16 %v141
    %v795 = vunpack.c.h.b16 %v141
    %v796 = vunpack.c.l.b16 %v142
    %v797 = vunpack.c.h.b16 %v142
    %v798 = vunpack.c.l.b16 %v143
    %v799 = vunpack.c.h.b16 %v143
    %v800 = vunpack.c.l.b16 %v144
    %v801 = vunpack.c.h.b16 %v144
    %v802 = vunpack.c.l.b16 %v145
    %v803 = vunpack.c.h.b16 %v145
    %v804 = vunpack.c.l.b16 %v146
    %v805 = vunpack.c.h.b16 %v146
    %v806 = vunpack.c.l.b16 %v147
    %v807 = vunpack.c.h.b16 %v147
    %v808 = vunpack.c.l.b16 %v148
    %v809 = vunpack.c.h.b16 %v148
    %v810 = vunpack.c.l.b16 %v149
    %v811 = vunpack.c.h.b16 %v149
    %v812 = vunpack.c.l.b16 %v150
    %v813 = vunpack.c.h.b16 %v150
    %v814 = vunpack.c.l.b16 %v151
    %v815 = vunpack.c.h.b16 %v151
    %v816 = vunpack.c.l.b16 %v152
    %v817 = vunpack.c.h.b16 %v152
    %v818 = vunpack.c.l.b16 %v153
    %v819 = vunpack.c.h.b16 %v153
    %v820 = vunpack.c.l.b16 %v154
    %v821 = vunpack.c.h.b16 %v154
    %v822 = vunpack.c.l.b16 %v155
    %v823 = vunpack.c.h.b16 %v155
    %v824 = vunpack.c.l.b16 %v156
    %v825 = vunpack.c.h.b16 %v156
    %v826 = vunpack.c.l.b16 %v157
    %v827 = vunpack.c.h.b16 %v157
    %v828 = vunpack.c.l.b16 %v158
    %v829 = vunpack.c.h.b16 %v158
    %v830 = vunpack.c.l.b16 %v159
    %v831 = vunpack.c.h.b16 %v159
    %v832 = vunpack.c.l.b16 %v160
    %v833 = vunpack.c.h.b16 %v160
    %v834 = vunpack.c.l.b16 %v161
    %v835 = vunpack.c.h.b16 %v161
    %v836 = vunpack.c.l.b16 %v162
    %v837 = vunpack.c.h.b16 %v162
    %v838 = vunpack.c.l.b16 %v163
    %v839 = vunpack.c.h.b16 %v163
    %v840 = vunpack.c.l.b16 %v164
    %v841 = vunpack.c.h.b16 %v164
    %v842 = vunpack.c.l.b16 %v165
    %v843 = vunpack.c.h.b16 %v165
    %v844 = vunpack.c.l.b16 %v166
    %v845 = vunpack.c.h.b16 %v166
    %v846 = vunpack.c.l.b16 %v167
    %v847 = vunpack.c.h.b16 %v167
    %v848 = vunpack.c.l.b16 %v168
    %v849 = vunpack.c.h.b16 %v168
    %v850 = vunpack.c.l.b16 %v169
    %v851 = vunpack.c.h.b16 %v169
    %v852 = vunpack.c.l.b16 %v170
    %v853 = vunpack.c.h.b16 %v170
    %v854 = vunpack.c.l.b16 %v171
    %v855 = vunpack.c.h.b16 %v171
    %v856 = vunpack.c.l.b16 %v172
    %v857 = vunpack.c.h.b16 %v172
    %v858 = vunpack.c.l.b16 %v173
    %v859 = vunpack.c.h.b16 %v173
    %v860 = vunpack.c.l.b16 %v174
    %v861 = vunpack.c.h.b16 %v174
    %v862 = vunpack.c.l.b16 %v175
    %v863 = vunpack.c.h.b16 %v175
    %v864 = vunpack.c.l.b16 %v176
    %v865 = vunpack.c.h.b16 %v176
    %v866 = vunpack.c.l.b16 %v177
    %v867 = vunpack.c.h.b16 %v177
    %v868 = vunpack.c.l.b16 %v178
    %v869 = vunpack.c.h.b16 %v178
    %v870 = vunpack.c.l.b16 %v179
    %v871 = vunpack.c.h.b16 %v179
    %v872 = vunpack.c.l.b16 %v180
    %v873 = vunpack.c.h.b16 %v180
    %v874 = vunpack.c.l.b16 %v181
    %v875 = vunpack.c.h.b16 %v181
    %v876 = vunpack.c.l.b16 %v182
    %v877 = vunpack.c.h.b16 %v182
    %v878 = vunpack.c.l.b16 %v183
    %v879 = vunpack.c.h.b16 %v183
    %v880 = vunpack.c.l.b16 %v184
    %v881 = vunpack.c.h.b16 %v184
    %v882 = vunpack.c.l.b16 %v185
    %v883 = vunpack.c.h.b16 %v185
    %v884 = vunpack.c.l.b16 %v186
    %v885 = vunpack.c.h.b16 %v186
    %v886 = vunpack.c.l.b16 %v187
    %v887 = vunpack.c.h.b16 %v187
    %v888 = vunpack.c.l.b16 %v188
    %v889 = vunpack.c.h.b16 %v188
    %v890 = vunpack.c.l.b16 %v189
    %v891 = vunpack.c.h.b16 %v189
    %v892 = vunpack.c.l.b16 %v190
    %v893 = vunpack.c.h.b16 %v190
    %v894 = vunpack.c.l.b16 %v191
    %v895 = vunpack.c.h.b16 %v191
    %v896 = vunpack.c.l.b16 %v192
    %v897 = vunpack.c.h.b16 %v192
    %v898 = vunpack.c.l.b16 %v193
    %v899 = vunpack.c.h.b16 %v193
    %v900 = vunpack.c.l.b16 %v194
    %v901 = vunpack.c.h.b16 %v194
    %v902 = vunpack.c.l.b16 %v195
    %v903 = vunpack.c.h.b16 %v195
    %v904 = vunpack.c.l.b16 %v196
    %v905 = vunpack.c.h.b16 %v196
    %v906 = vunpack.c.l.b16 %v197
    %v907 = vunpack.c.h.b16 %v197
    %v908 = vunpack.c.l.b16 %v198
    %v909 = vunpack.c.h.b16 %v198
    %v910 = vunpack.c.l.b16 %v199
    %v911 = vunpack.c.h.b16 %v199
    %v912 = vunpack.c.l.b16 %v200
    %v913 = vunpack.c.h.b16 %v200
    %v914 = vunpack.c.l.b16 %v201
    %v915 = vunpack.c.h.b16 %v201
    %v916 = vunpack.c.l.b16 %v202
    %v917 = vunpack.c.h.b16 %v202
    %v918 = vunpack.c.l.b16 %v203
    %v919 = vunpack.c.h.b16 %v203
    %v920 = vunpack.c.l.b16 %v204
    %v921 = vunpack.c.h.b16 %v204
    %v922 = vunpack.c.l.b16 %v205
    %v923 = vunpack.c.h.b16 %v205
    %v924 = vunpack.c.l.b16 %v206
    %v925 = vunpack.c.h.b16 %v206
    %v926 = vunpack.c.l.b16 %v207
    %v927 = vunpack.c.h.b16 %v207
    %v928 = vunpack.c.l.b16 %v208
    %v929 = vunpack.c.h.b16 %v208
    %v930 = vunpack.c.l.b16 %v209
    %v931 = vunpack.c.h.b16 %v209
    %v932 = vunpack.c.l.b16 %v210
    %v933 = vunpack.c.h.b16 %v210
    %v934 = vunpack.c.l.b16 %v211
    %v935 = vunpack.c.h.b16 %v211
    %v936 = vunpack.c.l.b16 %v212
    %v937 = vunpack.c.h.b16 %v212
    %v938 = vunpack.c.l.b16 %v213
    %v939 = vunpack.c.h.b16 %v213
    %v940 = vunpack.c.l.b16 %v214
    %v941 = vunpack.c.h.b16 %v214
    %v942 = vunpack.c.l.b16 %v215
    %v943 = vunpack.c.h.b16 %v215
    %v944 = vunpack.c.l.b16 %v216
    %v945 = vunpack.c.h.b16 %v216
    %v946 = vunpack.c.l.b16 %v217
    %v947 = vunpack.c.h.b16 %v217
    %v948 = vunpack.c.l.b16 %v218
    %v949 = vunpack.c.h.b16 %v218
    %v950 = vunpack.c.l.b16 %v219
    %v951 = vunpack.c.h.b16 %v219
    %v952 = vunpack.c.l.b16 %v220
    %v953 = vunpack.c.h.b16 %v220
    %v954 = vunpack.c.l.b16 %v221
    %v955 = vunpack.c.h.b16 %v221
    %v956 = vunpack.c.l.b16 %v222
    %v957 = vunpack.c.h.b16 %v222
    %v958 = vunpack.c.l.b16 %v223
    %v959 = vunpack.c.h.b16 %v223
    %v960 = vunpack.c.l.b16 %v224
    %v961 = vunpack.c.h.b16 %v224
    %v962 = vunpack.c.l.b16 %v225
    %v963 = vunpack.c.h.b16 %v225
    %v964 = vunpack.c.l.b16 %v226
    %v965 = vunpack.c.h.b16 %v226
    %v966 = vunpack.c.l.b16 %v227
    %v967 = vunpack.c.h.b16 %v227
    %v968 = vunpack.c.l.b16 %v228
    %v969 = vunpack.c.h.b16 %v228
    %v970 = vunpack.c.l.b16 %v229
    %v971 = vunpack.c.h.b16 %v229
    %v972 = vunpack.c.l.b16 %v230
    %v973 = vunpack.c.h.b16 %v230
    %v974 = vunpack.c.l.b16 %v231
    %v975 = vunpack.c.h.b16 %v231
    %v976 = vunpack.c.l.b16 %v232
    %v977 = vunpack.c.h.b16 %v232
    %v978 = vunpack.c.l.b16 %v233
    %v979 = vunpack.c.h.b16 %v233
    %v980 = vunpack.c.l.b16 %v234
    %v981 = vunpack.c.h.b16 %v234
    %v982 = vunpack.c.l.b16 %v235
    %v983 = vunpack.c.h.b16 %v235
    %v984 = vunpack.c.l.b16 %v236
    %v985 = vunpack.c.h.b16 %v236
    %v986 = vunpack.c.l.b16 %v237
    %v987 = vunpack.c.h.b16 %v237
    %v988 = vunpack.c.l.b16 %v238
    %v989 = vunpack.c.h.b16 %v238
    %v990 = vunpack.c.l.b16 %v239
    %v991 = vunpack.c.h.b16 %v239
    %v992 = vunpack.c.l.b16 %v240
    %v993 = vunpack.c.h.b16 %v240
    %v994 = vunpack.c.l.b16 %v241
    %v995 = vunpack.c.h.b16 %v241
    %v996 = vunpack.c.l.b16 %v242
    %v997 = vunpack.c.h.b16 %v242
    %v998 = vunpack.c.l.b16 %v243
    %v999 = vunpack.c.h.b16 %v243
    %v1000 = vunpack.c.l.b16 %v244
    %v1001 = vunpack.c.h.b16 %v244
    %v1002 = vunpack.c.l.b16 %v245
    %v1003 = vunpack.c.h.b16 %v245
    %v1004 = vunpack.c.l.b16 %v246
    %v1005 = vunpack.c.h.b16 %v246
    %v1006 = vunpack.c.l.b16 %v247
    %v1007 = vunpack.c.h.b16 %v247
    %v1008 = vunpack.c.l.b16 %v248
    %v1009 = vunpack.c.h.b16 %v248
    %v1010 = vunpack.c.l.b16 %v249
    %v1011 = vunpack.c.h.b16 %v249
    %v1012 = vunpack.c.l.b16 %v250
    %v1013 = vunpack.c.h.b16 %v250
    %v1014 = vunpack.c.l.b16 %v251
    %v1015 = vunpack.c.h.b16 %v251
    %v1016 = vunpack.c.l.b16 %v252
    %v1017 = vunpack.c.h.b16 %v252
    %v1018 = vunpack.c.l.b16 %v253
    %v1019 = vunpack.c.h.b16 %v253
    %v1020 = vunpack.c.l.b16 %v254
    %v1021 = vunpack.c.h.b16 %v254
    %v1022 = vunpack.c.l.b16 %v255
    %v1023 = vunpack.c.h.b16 %v255
    %v1024 = vunpack.c.l.b16 %v256
    %v1025 = vunpack.c.h.b16 %v256
    %v1026 = vunpack.c.l.b16 %v257
    %v1027 = vunpack.c.h.b16 %v257
    %v1028 = vunpack.c.l.b16 %v258
    %v1029 = vunpack.c.h.b16 %v258
    %v1030 = vunpack.c.l.b16 %v259
    %v1031 = vunpack.c.h.b16 %v259
    %v1032 = vunpack.c.l.b16 %v260
    %v1033 = vunpack.c.h.b16 %v260
    %v1034 = vunpack.c.l.b16 %v261
    %v1035 = vunpack.c.h.b16 %v261
    %v1036 = vunpack.c.l.b16 %v262
    %v1037 = vunpack.c.h.b16 %v262
    %v1038 = vunpack.c.l.b16 %v263
    %v1039 = vunpack.c.h.b16 %v263
    %v1040 = vunpack.c.l.b16 %v264
    %v1041 = vunpack.c.h.b16 %v264
    %v1042 = vunpack.c.l.b16 %v265
    %v1043 = vunpack.c.h.b16 %v265
    %v1044 = vunpack.c.l.b16 %v266
    %v1045 = vunpack.c.h.b16 %v266
    %v1046 = vunpack.c.l.b16 %v267
    %v1047 = vunpack.c.h.b16 %v267
    %v1048 = vunpack.c.l.b16 %v268
    %v1049 = vunpack.c.h.b16 %v268
    %v1050 = vunpack.c.l.b16 %v269
    %v1051 = vunpack.c.h.b16 %v269
    %v1052 = vunpack.c.l.b16 %v270
    %v1053 = vunpack.c.h.b16 %v270
    %v1054 = vunpack.c.l.b16 %v271
    %v1055 = vunpack.c.h.b16 %v271
    %v1056 = vunpack.c.l.b16 %v272
    %v1057 = vunpack.c.h.b16 %v272
    %v1058 = vunpack.c.l.b16 %v273
    %v1059 = vunpack.c.h.b16 %v273
    %v1060 = vunpack.c.l.b16 %v274
    %v1061 = vunpack.c.h.b16 %v274
    %v1062 = vunpack.c.l.b16 %v275
    %v1063 = vunpack.c.h.b16 %v275
    %v1064 = vunpack.c.l.b16 %v276
    %v1065 = vunpack.c.h.b16 %v276
    %v1066 = vunpack.c.l.b16 %v277
    %v1067 = vunpack.c.h.b16 %v277
    %v1068 = vunpack.c.l.b16 %v278
    %v1069 = vunpack.c.h.b16 %v278
    %v1070 = vunpack.c.l.b16 %v279
    %v1071 = vunpack.c.h.b16 %v279
    %v1072 = vunpack.c.l.b16 %v280
    %v1073 = vunpack.c.h.b16 %v280
    %v1074 = vunpack.c.l.b16 %v281
    %v1075 = vunpack.c.h.b16 %v281
    %v1076 = vunpack.c.l.b16 %v282
    %v1077 = vunpack.c.h.b16 %v282
    %v1078 = vunpack.c.l.b16 %v283
    %v1079 = vunpack.c.h.b16 %v283
    %v1080 = vunpack.c.l.b16 %v284
    %v1081 = vunpack.c.h.b16 %v284
    %v1082 = vunpack.c.l.b16 %v285
    %v1083 = vunpack.c.h.b16 %v285
    %v1084 = vunpack.c.l.b16 %v286
    %v1085 = vunpack.c.h.b16 %v286
    %v1086 = vunpack.c.l.b16 %v287
    %v1087 = vunpack.c.h.b16 %v287
    %v1088 = vunpack.c.l.b16 %v288
    %v1089 = vunpack.c.h.b16 %v288
    %v1090 = vunpack.c.l.b16 %v289
    %v1091 = vunpack.c.h.b16 %v289
    %v1092 = vunpack.c.l.b16 %v290
    %v1093 = vunpack.c.h.b16 %v290
    %v1094 = vunpack.c.l.b16 %v291
    %v1095 = vunpack.c.h.b16 %v291
    %v1096 = vunpack.c.l.b16 %v292
    %v1097 = vunpack.c.h.b16 %v292
    %v1098 = vunpack.c.l.b16 %v293
    %v1099 = vunpack.c.h.b16 %v293
    %v1100 = vunpack.c.l.b16 %v294
    %v1101 = vunpack.c.h.b16 %v294
    %v1102 = vunpack.c.l.b16 %v295
    %v1103 = vunpack.c.h.b16 %v295
    %v1104 = vunpack.c.l.b16 %v296
    %v1105 = vunpack.c.h.b16 %v296
    %v1106 = vunpack.c.l.b16 %v297
    %v1107 = vunpack.c.h.b16 %v297
    %v1108 = vunpack.c.l.b16 %v298
    %v1109 = vunpack.c.h.b16 %v298
    %v1110 = vunpack.c.l.b16 %v299
    %v1111 = vunpack.c.h.b16 %v299
    %v1112 = vunpack.c.l.b16 %v300
    %v1113 = vunpack.c.h.b16 %v300
    %v1114 = vunpack.c.l.b16 %v301
    %v1115 = vunpack.c.h.b16 %v301
    %v1116 = vunpack.c.l.b16 %v302
    %v1117 = vunpack.c.h.b16 %v302
    %v1118 = vunpack.c.l.b16 %v303
    %v1119 = vunpack.c.h.b16 %v303
    %v1120 = vunpack.c.l.b16 %v304
    %v1121 = vunpack.c.h.b16 %v304
    %v1122 = vunpack.c.l.b16 %v305
    %v1123 = vunpack.c.h.b16 %v305
    %v1124 = vunpack.c.l.b16 %v306
    %v1125 = vunpack.c.h.b16 %v306
    %v1126 = vunpack.c.l.b16 %v307
    %v1127 = vunpack.c.h.b16 %v307
    %v1128 = vunpack.c.l.b16 %v308
    %v1129 = vunpack.c.h.b16 %v308
    %v1130 = vunpack.c.l.b16 %v309
    %v1131 = vunpack.c.h.b16 %v309
    %v1132 = vunpack.c.l.b16 %v310
    %v1133 = vunpack.c.h.b16 %v310
    %v1134 = vunpack.c.l.b16 %v311
    %v1135 = vunpack.c.h.b16 %v311
    %v1136 = vunpack.c.l.b16 %v312
    %v1137 = vunpack.c.h.b16 %v312
    %v1138 = vunpack.c.l.b16 %v313
    %v1139 = vunpack.c.h.b16 %v313
    %v1140 = vunpack.c.l.b16 %v314
    %v1141 = vunpack.c.h.b16 %v314
    %v1142 = vunpack.c.l.b16 %v315
    %v1143 = vunpack.c.h.b16 %v315
    %v1144 = vunpack.c.l.b16 %v316
    %v1145 = vunpack.c.h.b16 %v316
    %v1146 = vunpack.c.l.b16 %v317
    %v1147 = vunpack.c.h.b16 %v317
    %v1148 = vunpack.c.l.b16 %v318
    %v1149 = vunpack.c.h.b16 %v318
    %v1150 = vunpack.c.l.b16 %v319
    %v1151 = vunpack.c.h.b16 %v319
    %v1152 = vunpack.c.l.b16 %v320
    %v1153 = vunpack.c.h.b16 %v320
    %v1154 = vunpack.c.l.b16 %v321
    %v1155 = vunpack.c.h.b16 %v321
    %v1156 = vunpack.c.l.b16 %v322
    %v1157 = vunpack.c.h.b16 %v322
    %v1158 = vunpack.c.l.b16 %v323
    %v1159 = vunpack.c.h.b16 %v323
    %v1160 = vunpack.c.l.b16 %v324
    %v1161 = vunpack.c.h.b16 %v324
    %v1162 = vunpack.c.l.b16 %v325
    %v1163 = vunpack.c.h.b16 %v325
    %v1164 = vunpack.c.l.b16 %v326
    %v1165 = vunpack.c.h.b16 %v326
    %v1166 = vunpack.c.l.b16 %v327
    %v1167 = vunpack.c.h.b16 %v327
    %v1168 = vunpack.c.l.b16 %v328
    %v1169 = vunpack.c.h.b16 %v328
    %v1170 = vunpack.c.l.b16 %v329
    %v1171 = vunpack.c.h.b16 %v329
    %v1172 = vunpack.c.l.b16 %v330
    %v1173 = vunpack.c.h.b16 %v330
    %v1174 = vunpack.c.l.b16 %v331
    %v1175 = vunpack.c.h.b16 %v331
    %v1176 = vunpack.c.l.b16 %v332
    %v1177 = vunpack.c.h.b16 %v332
    %v1178 = vunpack.c.l.b16 %v333
    %v1179 = vunpack.c.h.b16 %v333
    %v1180 = vunpack.c.l.b16 %v334
    %v1181 = vunpack.c.h.b16 %v334
    %v1182 = vunpack.c.l.b16 %v335
    %v1183 = vunpack.c.h.b16 %v335
    %v1184 = vunpack.c.l.b16 %v336
    %v1185 = vunpack.c.h.b16 %v336
    %v1186 = vunpack.c.l.b16 %v337
    %v1187 = vunpack.c.h.b16 %v337
    %v1188 = vunpack.c.l.b16 %v338
    %v1189 = vunpack.c.h.b16 %v338
    %v1190 = vunpack.c.l.b16 %v339
    %v1191 = vunpack.c.h.b16 %v339
    %v1192 = vunpack.c.l.b16 %v340
    %v1193 = vunpack.c.h.b16 %v340
    %v1194 = vunpack.c.l.b16 %v341
    %v1195 = vunpack.c.h.b16 %v341
    %v1196 = vunpack.c.l.b16 %v342
    %v1197 = vunpack.c.h.b16 %v342
    %v1198 = vunpack.c.l.b16 %v343
    %v1199 = vunpack.c.h.b16 %v343
    %v1200 = vunpack.c.l.b16 %v344
    %v1201 = vunpack.c.h.b16 %v344
    %v1202 = vunpack.c.l.b16 %v345
    %v1203 = vunpack.c.h.b16 %v345
    %v1204 = vunpack.c.l.b16 %v346
    %v1205 = vunpack.c.h.b16 %v346
    %v1206 = vunpack.c.l.b16 %v347
    %v1207 = vunpack.c.h.b16 %v347
    %v1208 = vunpack.c.l.b16 %v348
    %v1209 = vunpack.c.h.b16 %v348
    %v1210 = vunpack.c.l.b16 %v349
    %v1211 = vunpack.c.h.b16 %v349
    %v1212 = vunpack.c.l.b16 %v350
    %v1213 = vunpack.c.h.b16 %v350
    %v1214 = vunpack.c.l.b16 %v351
    %v1215 = vunpack.c.h.b16 %v351
    %v1216 = vunpack.c.l.b16 %v352
    %v1217 = vunpack.c.h.b16 %v352
    %v1218 = vunpack.c.l.b16 %v353
    %v1219 = vunpack.c.h.b16 %v353
    %v1220 = vunpack.c.l.b16 %v354
    %v1221 = vunpack.c.h.b16 %v354
    %v1222 = vunpack.c.l.b16 %v355
    %v1223 = vunpack.c.h.b16 %v355
    %v1224 = vunpack.c.l.b16 %v356
    %v1225 = vunpack.c.h.b16 %v356
    %v1226 = vunpack.c.l.b16 %v357
    %v1227 = vunpack.c.h.b16 %v357
    %v1228 = vunpack.c.l.b16 %v358
    %v1229 = vunpack.c.h.b16 %v358
    %v1230 = vunpack.c.l.b16 %v359
    %v1231 = vunpack.c.h.b16 %v359
    %v1232 = vunpack.c.l.b16 %v360
    %v1233 = vunpack.c.h.b16 %v360
    %v1234 = vunpack.c.l.b16 %v361
    %v1235 = vunpack.c.h.b16 %v361
    %v1236 = vunpack.c.l.b16 %v362
    %v1237 = vunpack.c.h.b16 %v362
    %v1238 = vunpack.c.l.b16 %v363
    %v1239 = vunpack.c.h.b16 %v363
    %v1240 = vunpack.c.l.b16 %v364
    %v1241 = vunpack.c.h.b16 %v364
    %v1242 = vunpack.c.l.b16 %v365
    %v1243 = vunpack.c.h.b16 %v365
    %v1244 = vunpack.c.l.b16 %v366
    %v1245 = vunpack.c.h.b16 %v366
    %v1246 = vunpack.c.l.b16 %v367
    %v1247 = vunpack.c.h.b16 %v367
    %v1248 = vunpack.c.l.b16 %v368
    %v1249 = vunpack.c.h.b16 %v368
    %v1250 = vunpack.c.l.b16 %v369
    %v1251 = vunpack.c.h.b16 %v369
    %v1252 = vunpack.c.l.b16 %v370
    %v1253 = vunpack.c.h.b16 %v370
    %v1254 = vunpack.c.l.b16 %v371
    %v1255 = vunpack.c.h.b16 %v371
    %v1256 = vunpack.c.l.b16 %v372
    %v1257 = vunpack.c.h.b16 %v372
    %v1258 = vunpack.c.l.b16 %v373
    %v1259 = vunpack.c.h.b16 %v373
    %v1260 = vunpack.c.l.b16 %v374
    %v1261 = vunpack.c.h.b16 %v374
    %v1262 = vunpack.c.l.b16 %v375
    %v1263 = vunpack.c.h.b16 %v375
    %v1264 = vunpack.c.l.b16 %v376
    %v1265 = vunpack.c.h.b16 %v376
    %v1266 = vunpack.c.l.b16 %v377
    %v1267 = vunpack.c.h.b16 %v377
    %v1268 = vunpack.c.l.b16 %v378
    %v1269 = vunpack.c.h.b16 %v378
    %v1270 = vunpack.c.l.b16 %v379
    %v1271 = vunpack.c.h.b16 %v379
    %v1272 = vunpack.c.l.b16 %v380
    %v1273 = vunpack.c.h.b16 %v380
    %v1274 = vunpack.c.l.b16 %v381
    %v1275 = vunpack.c.h.b16 %v381
    %v1276 = vunpack.c.l.b16 %v382
    %v1277 = vunpack.c.h.b16 %v382
    %v1278 = vunpack.c.l.b16 %v383
    %v1279 = vunpack.c.h.b16 %v383
    %v1280 = vpack.c.b16 %v710, %v704
    %v1281 = vpack.c.b16 %v711, %v705
    %v1282 = vpack.c.b16 %v712, %v706
    %v1283 = vpack.c.b16 %v713, %v707
    %v1284 = vpack.c.b16 %v714, %v708
    %v1285 = vpack.c.b16 %v715, %v709
    %v1286 = vpack.c.b16 %v722, %v716
    %v1287 = vpack.c.b16 %v723, %v717
    %v1288 = vpack.c.b16 %v724, %v718
    %v1289 = vpack.c.b16 %v725, %v719
    %v1290 = vpack.c.b16 %v726, %v720
    %v1291 = vpack.c.b16 %v727, %v721
    %v1292 = vpack.c.b16 %v734, %v728
    %v1293 = vpack.c.b16 %v735, %v729
    %v1294 = vpack.c.b16 %v736, %v730
    %v1295 = vpack.c.b16 %v737, %v731
    %v1296 = vpack.c.b16 %v738, %v732
    %v1297 = vpack.c.b16 %v739, %v733
    %v1298 = vpack.c.b16 %v746, %v740
    %v1299 = vpack.c.b16 %v747, %v741
    %v1300 = vpack.c.b16 %v748, %v742
    %v1301 = vpack.c.b16 %v749, %v743
    %v1302 = vpack.c.b16 %v750, %v744
    %v1303 = vpack.c.b16 %v751, %v745
    %v1304 = vpack.c.b16 %v758, %v752
    %v1305 = vpack.c.b16 %v759, %v753
    %v1306 = vpack.c.b16 %v760, %v754
    %v1307 = vpack.c.b16 %v761, %v755
    %v1308 = vpack.c.b16 %v762, %v756
    %v1309 = vpack.c.b16 %v763, %v757
    %v1310 = vpack.c.b16 %v770, %v764
    %v1311 = vpack.c.b16 %v771, %v765
    %v1312 = vpack.c.b16 %v772, %v766
    %v1313 = vpack.c.b16 %v773, %v767
    %v1314 = vpack.c.b16 %v774, %v768
    %v1315 = vpack.c.b16 %v775, %v769
    %v1316 = vpack.c.b16 %v782, %v776
    %v1317 = vpack.c.b16 %v783, %v777
    %v1318 = vpack.c.b16 %v784, %v778
    %v1319 = vpack.c.b16 %v785, %v779
    %v1320 = vpack.c.b16 %v786, %v780
    %v1321 = vpack.c.b16 %v787, %v781
    %v1322 = vpack.c.b16 %v794, %v788
    %v1323 = vpack.c.b16 %v795, %v789
    %v1324 = vpack.c.b16 %v796, %v790
    %v1325 = vpack.c.b16 %v797, %v791
    %v1326 = vpack.c.b16 %v798, %v792
    %v1327 = vpack.c.b16 %v799, %v793
    %v1328 = vpack.c.b16 %v806, %v800
    %v1329 = vpack.c.b16 %v807, %v801
    %v1330 = vpack.c.b16 %v808, %v802
    %v1331 = vpack.c.b16 %v809, %v803
    %v1332 = vpack.c.b16 %v810, %v804
    %v1333 = vpack.c.b16 %v811, %v805
    %v1334 = vpack.c.b16 %v818, %v812
    %v1335 = vpack.c.b16 %v819, %v813
    %v1336 = vpack.c.b16 %v820, %v814
    %v1337 = vpack.c.b16 %v821, %v815
    %v1338 = vpack.c.b16 %v822, %v816
    %v1339 = vpack.c.b16 %v823, %v817
    %v1340 = vpack.c.b16 %v830, %v824
    %v1341 = vpack.c.b16 %v831, %v825
    %v1342 = vpack.c.b16 %v832, %v826
    %v1343 = vpack.c.b16 %v833, %v827
    %v1344 = vpack.c.b16 %v834, %v828
    %v1345 = vpack.c.b16 %v835, %v829
    %v1346 = vpack.c.b16 %v842, %v836
    %v1347 = vpack.c.b16 %v843, %v837
    %v1348 = vpack.c.b16 %v844, %v838
    %v1349 = vpack.c.b16 %v845, %v839
    %v1350 = vpack.c.b16 %v846, %v840
    %v1351 = vpack.c.b16 %v847, %v841
    %v1352 = vpack.c.b16 %v854, %v848
    %v1353 = vpack.c.b16 %v855, %v849
    %v1354 = vpack.c.b16 %v856, %v850
    %v1355 = vpack.c.b16 %v857, %v851
    %v1356 = vpack.c.b16 %v858, %v852
    %v1357 = vpack.c.b16 %v859, %v853
    %v1358 = vpack.c.b16 %v866, %v860
    %v1359 = vpack.c.b16 %v867, %v861
    %v1360 = vpack.c.b16 %v868, %v862
    %v1361 = vpack.c.b16 %v869, %v863
    %v1362 = vpack.c.b16 %v870, %v864
    %v1363 = vpack.c.b16 %v871, %v865
    %v1364 = vpack.c.b16 %v878, %v872
    %v1365 = vpack.c.b16 %v879, %v873
    %v1366 = vpack.c.b16 %v880, %v874
    %v1367 = vpack.c.b16 %v881, %v875
    %v1368 = vpack.c.b16 %v882, %v876
    %v1369 = vpack.c.b16 %v883, %v877
    %v1370 = vpack.c.b16 %v890, %v884
    %v1371 = vpack.c.b16 %v891, %v885
    %v1372 = vpack.c.b16 %v892, %v886
    %v1373 = vpack.c.b16 %v893, %v887
    %v1374 = vpack.c.b16 %v894, %v888
    %v1375 = vpack.c.b16 %v895, %v889
    %v1376 = vpack.c.b16 %v902, %v896
    %v1377 = vpack.c.b16 %v903, %v897
    %v1378 = vpack.c.b16 %v904, %v898
    %v1379 = vpack.c.b16 %v905, %v899
    %v1380 = vpack.c.b16 %v906, %v900
    %v1381 = vpack.c.b16 %v907, %v901
    %v1382 = vpack.c.b16 %v914, %v908
    %v1383 = vpack.c.b16 %v915, %v909
    %v1384 = vpack.c.b16 %v916, %v910
    %v1385 = vpack.c.b16 %v917, %v911
    %v1386 = vpack.c.b16 %v918, %v912
    %v1387 = vpack.c.b16 %v919, %v913
    %v1388 = vpack.c.b16 %v926, %v920
    %v1389 = vpack.c.b16 %v927, %v921
    %v1390 = vpack.c.b16 %v928, %v922
    %v1391 = vpack.c.b16 %v929, %v923
    %v1392 = vpack.c.b16 %v930, %v924
    %v1393 = vpack.c.b16 %v931, %v925
    %v1394 = vpack.c.b16 %v938, %v932
    %v1395 = vpack.c.b16 %v939, %v933
    %v1396 = vpack.c.b16 %v940, %v934
    %v1397 = vpack.c.b16 %v941, %v935
    %v1398 = vpack.c.b16 %v942, %v936
    %v1399 = vpack.c.b16 %v943, %v937
    %v1400 = vpack.c.b16 %v950, %v944
    %v1401 = vpack.c.b16 %v951, %v945
    %v1402 = vpack.c.b16 %v952, %v946
    %v1403 = vpack.c.b16 %v953, %v947
    %v1404 = vpack.c.b16 %v954, %v948
    %v1405 = vpack.c.b16 %v955, %v949
    %v1406 = vpack.c.b16 %v962, %v956
    %v1407 = vpack.c.b16 %v963, %v957
    %v1408 = vpack.c.b16 %v964, %v958
    %v1409 = vpack.c.b16 %v965, %v959
    %v1410 = vpack.c.b16 %v966, %v960
    %v1411 = vpack.c.b16 %v967, %v961
    %v1412 = vpack.c.b16 %v974, %v968
    %v1413 = vpack.c.b16 %v975, %v969
    %v1414 = vpack.c.b16 %v976, %v970
    %v1415 = vpack.c.b16 %v977, %v971
    %v1416 = vpack.c.b16 %v978, %v972
    %v1417 = vpack.c.b16 %v979, %v973
    %v1418 = vpack.c.b16 %v986, %v980
    %v1419 = vpack.c.b16 %v987, %v981
    %v1420 = vpack.c.b16 %v988, %v982
    %v1421 = vpack.c.b16 %v989, %v983
    %v1422 = vpack.c.b16 %v990, %v984
    %v1423 = vpack.c.b16 %v991, %v985
    %v1424 = vpack.c.b16 %v998, %v992
    %v1425 = vpack.c.b16 %v999, %v993
    %v1426 = vpack.c.b16 %v1000, %v994
    %v1427 = vpack.c.b16 %v1001, %v995
    %v1428 = vpack.c.b16 %v1002, %v996
    %v1429 = vpack.c.b16 %v1003, %v997
    %v1430 = vpack.c.b16 %v1010, %v1004
    %v1431 = vpack.c.b16 %v1011, %v1005
    %v1432 = vpack.c.b16 %v1012, %v1006
    %v1433 = vpack.c.b16 %v1013, %v1007
    %v1434 = vpack.c.b16 %v1014, %v1008
    %v1435 = vpack.c.b16 %v1015, %v1009
    %v1436 = vpack.c.b16 %v1022, %v1016
    %v1437 = vpack.c.b16 %v1023, %v1017
    %v1438 = vpack.c.b16 %v1024, %v1018
    %v1439 = vpack.c.b16 %v1025, %v1019
    %v1440 = vpack.c.b16 %v1026, %v1020
    %v1441 = vpack.c.b16 %v1027, %v1021
    %v1442 = vpack.c.b16 %v1034, %v1028
    %v1443 = vpack.c.b16 %v1035, %v1029
    %v1444 = vpack.c.b16 %v1036, %v1030
    %v1445 = vpack.c.b16 %v1037, %v1031
    %v1446 = vpack.c.b16 %v1038, %v1032
    %v1447 = vpack.c.b16 %v1039, %v1033
    %v1448 = vpack.c.b16 %v1046, %v1040
    %v1449 = vpack.c.b16 %v1047, %v1041
    %v1450 = vpack.c.b16 %v1048, %v1042
    %v1451 = vpack.c.b16 %v1049, %v1043
    %v1452 = vpack.c.b16 %v1050, %v1044
    %v1453 = vpack.c.b16 %v1051, %v1045
    %v1454 = vpack.c.b16 %v1058, %v1052
    %v1455 = vpack.c.b16 %v1059, %v1053
    %v1456 = vpack.c.b16 %v1060, %v1054
    %v1457 = vpack.c.b16 %v1061, %v1055
    %v1458 = vpack.c.b16 %v1062, %v1056
    %v1459 = vpack.c.b16 %v1063, %v1057
    %v1460 = vpack.c.b16 %v1070, %v1064
    %v1461 = vpack.c.b16 %v1071, %v1065
    %v1462 = vpack.c.b16 %v1072, %v1066
    %v1463 = vpack.c.b16 %v1073, %v1067
    %v1464 = vpack.c.b16 %v1074, %v1068
    %v1465 = vpack.c.b16 %v1075, %v1069
    %v1466 = vpack.c.b16 %v1082, %v1076
    %v1467 = vpack.c.b16 %v1083, %v1077
    %v1468 = vpack.c.b16 %v1084, %v1078
    %v1469 = vpack.c.b16 %v1085, %v1079
    %v1470 = vpack.c.b16 %v1086, %v1080
    %v1471 = vpack.c.b16 %v1087, %v1081
    %v1472 = vpack.c.b16 %v1094, %v1088
    %v1473 = vpack.c.b16 %v1095, %v1089
    %v1474 = vpack.c.b16 %v1096, %v1090
    %v1475 = vpack.c.b16 %v1097, %v1091
    %v1476 = vpack.c.b16 %v1098, %v1092
    %v1477 = vpack.c.b16 %v1099, %v1093
    %v1478 = vpack.c.b16 %v1106, %v1100
    %v1479 = vpack.c.b16 %v1107, %v1101
    %v1480 = vpack.c.b16 %v1108, %v1102
    %v1481 = vpack.c.b16 %v1109, %v1103
    %v1482 = vpack.c.b16 %v1110, %v1104
    %v1483 = vpack.c.b16 %v1111, %v1105
    %v1484 = vpack.c.b16 %v1118, %v1112
    %v1485 = vpack.c.b16 %v1119, %v1113
    %v1486 = vpack.c.b16 %v1120, %v1114
    %v1487 = vpack.c.b16 %v1121, %v1115
    %v1488 = vpack.c.b16 %v1122, %v1116
    %v1489 = vpack.c.b16 %v1123, %v1117
    %v1490 = vpack.c.b16 %v1130, %v1124
    %v1491 = vpack.c.b16 %v1131, %v1125
    %v1492 = vpack.c.b16 %v1132, %v1126
    %v1493 = vpack.c.b16 %v1133, %v1127
    %v1494 = vpack.c.b16 %v1134, %v1128
    %v1495 = vpack.c.b16 %v1135, %v1129
    %v1496 = vpack.c.b16 %v1142, %v1136
    %v1497 = vpack.c.b16 %v1143, %v1137
    %v1498 = vpack.c.b16 %v1144, %v1138
    %v1499 = vpack.c.b16 %v1145, %v1139
    %v1500 = vpack.c.b16 %v1146, %v1140
    %v1501 = vpack.c.b16 %v1147, %v1141
    %v1502 = vpack.c.b16 %v1154, %v1148
    %v1503 = vpack.c.b16 %v1155, %v1149
    %v1504 = vpack.c.b16 %v1156, %v1150
    %v1505 = vpack.c.b16 %v1157, %v1151
    %v1506 = vpack.c.b16 %v1158, %v1152
    %v1507 = vpack.c.b16 %v1159, %v1153
    %v1508 = vpack.c.b16 %v1166, %v1160
    %v1509 = vpack.c.b16 %v1167, %v1161
    %v1510 = vpack.c.b16 %v1168, %v1162
    %v1511 = vpack.c.b16 %v1169, %v1163
    %v1512 = vpack.c.b16 %v1170, %v1164
    %v1513 = vpack.c.b16 %v1171, %v1165
    %v1514 = vpack.c.b16 %v1178, %v1172
    %v1515 = vpack.c.b16 %v1179, %v1173
    %v1516 = vpack.c.b16 %v1180, %v1174
    %v1517 = vpack.c.b16 %v1181, %v1175
    %v1518 = vpack.c.b16 %v1182, %v1176
    %v1519 = vpack.c.b16 %v1183, %v1177
    %v1520 = vpack.c.b16 %v1190, %v1184
    %v1521 = vpack.c.b16 %v1191, %v1185
    %v1522 = vpack.c.b16 %v1192, %v1186
    %v1523 = vpack.c.b16 %v1193, %v1187
    %v1524 = vpack.c.b16 %v1194, %v1188
    %v1525 = vpack.c.b16 %v1195, %v1189
    %v1526 = vpack.c.b16 %v1202, %v1196
    %v1527 = vpack.c.b16 %v1203, %v1197
    %v1528 = vpack.c.b16 %v1204, %v1198
    %v1529 = vpack.c.b16 %v1205, %v1199
    %v1530 = vpack.c.b16 %v1206, %v1200
    %v1531 = vpack.c.b16 %v1207, %v1201
    %v1532 = vpack.c.b16 %v1214, %v1208
    %v1533 = vpack.c.b16 %v1215, %v1209
    %v1534 = vpack.c.b16 %v1216, %v1210
    %v1535 = vpack.c.b16 %v1217, %v1211
    %v1536 = vpack.c.b16 %v1218, %v1212
    %v1537 = vpack.c.b16 %v1219, %v1213
    %v1538 = vpack.c.b16 %v1226, %v1220
    %v1539 = vpack.c.b16 %v1227, %v1221
    %v1540 = vpack.c.b16 %v1228, %v1222
    %v1541 = vpack.c.b16 %v1229, %v1223
    %v1542 = vpack.c.b16 %v1230, %v1224
    %v1543 = vpack.c.b16 %v1231, %v1225
    %v1544 = vpack.c.b16 %v1238, %v1232
    %v1545 = vpack.c.b16 %v1239, %v1233
    %v1546 = vpack.c.b16 %v1240, %v1234
    %v1547 = vpack.c.b16 %v1241, %v1235
    %v1548 = vpack.c.b16 %v1242, %v1236
    %v1549 = vpack.c.b16 %v1243, %v1237
    %v1550 = vpack.c.b16 %v1250, %v1244
    %v1551 = vpack.c.b16 %v1251, %v1245
    %v1552 = vpack.c.b16 %v1252, %v1246
    %v1553 = vpack.c.b16 %v1253, %v1247
    %v1554 = vpack.c.b16 %v1254, %v1248
    %v1555 = vpack.c.b16 %v1255, %v1249
    %v1556 = vpack.c.b16 %v1262, %v1256
    %v1557 = vpack.c.b16 %v1263, %v1257
    %v1558 = vpack.c.b16 %v1264, %v1258
    %v1559 = vpack.c.b16 %v1265, %v1259
    %v1560 = vpack.c.b16 %v1266, %v1260
    %v1561 = vpack.c.b16 %v1267, %v1261
    %v1562 = vpack.c.b16 %v1274, %v1268
    %v1563 = vpack.c.b16 %v1275, %v1269
    %v1564 = vpack.c.b16 %v1276, %v1270
    %v1565 = vpack.c.b16 %v1277, %v1271
    %v1566 = vpack.c.b16 %v1278, %v1272
    %v1567 = vpack.c.b16 %v1279, %v1273
    %1856 = vmatprep.subr.bf16.mxu0 %v1323
    %1857 = vmatpush1.bf16.msra.mxu0 %v1322
    %1858 = vmatprep.subr.bf16.mxu0 %v1317
    %1859 = vmatpush1.bf16.msra.mxu0 %v1316
    %1860 = vmatprep.subr.bf16.mxu0 %v1311
    %1861 = vmatpush1.bf16.msra.mxu0 %v1310
    %1862 = vmatprep.subr.bf16.mxu0 %v1305
    %1863 = vmatpush1.bf16.msra.mxu0 %v1304
    %1864 = vmatprep.subr.bf16.mxu0 %v1299
    %1865 = vmatpush1.bf16.msra.mxu0 %v1298
    %1866 = vmatprep.subr.bf16.mxu0 %v1293
    %1867 = vmatpush1.bf16.msra.mxu0 %v1292
    %1868 = vmatprep.subr.bf16.mxu0 %v1287
    %1869 = vmatpush1.bf16.msra.mxu0 %v1286
    %1870 = vmatprep.subr.bf16.mxu0 %v1281
    %1871 = vmatpush1.bf16.msra.mxu0 %v1280
    %1872 = vmatprep.subr.bf16.mxu0 %v1371
    %1873 = vmatpush2.bf16.msra.mxu0 %v1370
    %1874 = vmatprep.subr.bf16.mxu0 %v1365
    %1875 = vmatpush2.bf16.msra.mxu0 %v1364
    %1876 = vmatprep.subr.bf16.mxu0 %v1359
    %1877 = vmatpush2.bf16.msra.mxu0 %v1358
    %1878 = vmatprep.subr.bf16.mxu0 %v1353
    %1879 = vmatpush2.bf16.msra.mxu0 %v1352
    %1880 = vmatprep.subr.bf16.mxu0 %v1347
    %1881 = vmatpush2.bf16.msra.mxu0 %v1346
    %1882 = vmatprep.subr.bf16.mxu0 %v1341
    %1883 = vmatpush2.bf16.msra.mxu0 %v1340
    %1884 = vmatprep.subr.bf16.mxu0 %v1335
    %1885 = vmatpush2.bf16.msra.mxu0 %v1334
    %1886 = vmatprep.subr.bf16.mxu0 %v1329
    %1887 = vmatpush2.bf16.msra.mxu0 %v1328
    %1888 = vmatprep.mubr.bf16.mxu0 %v91
    %1889 = vmatmul.mubr.bf16.gmra.mxu0 %v90
    %v1890 = vpop.f32.mrf.mxu0
    %v1891 = vadd.f32 %v389, %v1890
    %v1892 = vpop.f32.mrf.mxu0
    %v1893 = vadd.f32 %v393, %v1892
    %v1894 = vpop.f32.mrf.mxu0
    %v1895 = vpop.f32.mrf.mxu0
    %1896 = vdwg.mxu0
    %1897 = vmatprep.subr.bf16.mxu0 %v1419
    %1898 = vmatpush1.bf16.msra.mxu0 %v1418
    %1899 = vmatprep.subr.bf16.mxu0 %v1413
    %1900 = vmatpush1.bf16.msra.mxu0 %v1412
    %1901 = vmatprep.subr.bf16.mxu0 %v1407
    %1902 = vmatpush1.bf16.msra.mxu0 %v1406
    %1903 = vmatprep.subr.bf16.mxu0 %v1401
    %1904 = vmatpush1.bf16.msra.mxu0 %v1400
    %1905 = vmatprep.subr.bf16.mxu0 %v1395
    %1906 = vmatpush1.bf16.msra.mxu0 %v1394
    %1907 = vmatprep.subr.bf16.mxu0 %v1389
    %1908 = vmatpush1.bf16.msra.mxu0 %v1388
    %1909 = vmatprep.subr.bf16.mxu0 %v1383
    %1910 = vmatpush1.bf16.msra.mxu0 %v1382
    %1911 = vmatprep.subr.bf16.mxu0 %v1377
    %1912 = vmatpush1.bf16.msra.mxu0 %v1376
    %1913 = vmatprep.subr.bf16.mxu0 %v1467
    %1914 = vmatpush2.bf16.msra.mxu0 %v1466
    %1915 = vmatprep.subr.bf16.mxu0 %v1461
    %1916 = vmatpush2.bf16.msra.mxu0 %v1460
    %1917 = vmatprep.subr.bf16.mxu0 %v1455
    %1918 = vmatpush2.bf16.msra.mxu0 %v1454
    %1919 = vmatprep.subr.bf16.mxu0 %v1449
    %1920 = vmatpush2.bf16.msra.mxu0 %v1448
    %1921 = vmatprep.subr.bf16.mxu0 %v1443
    %1922 = vmatpush2.bf16.msra.mxu0 %v1442
    %1923 = vmatprep.subr.bf16.mxu0 %v1437
    %1924 = vmatpush2.bf16.msra.mxu0 %v1436
    %1925 = vmatprep.subr.bf16.mxu0 %v1431
    %1926 = vmatpush2.bf16.msra.mxu0 %v1430
    %1927 = vmatprep.subr.bf16.mxu0 %v1425
    %1928 = vmatpush2.bf16.msra.mxu0 %v1424
    %1929 = vmatprep.mubr.bf16.mxu0 %v93
    %1930 = vmatmul.mubr.bf16.gmra.mxu0 %v92
    %v1931 = vpop.f32.mrf.mxu0
    %v1932 = vadd.f32 %v1891, %v1931
    %v1933 = vpop.f32.mrf.mxu0
    %v1934 = vadd.f32 %v1893, %v1933
    %v1935 = vpop.f32.mrf.mxu0
    %v1936 = vpop.f32.mrf.mxu0
    %1937 = vdwg.mxu0
    %1938 = vmatprep.subr.bf16.mxu0 %v1515
    %1939 = vmatpush1.bf16.msra.mxu0 %v1514
    %1940 = vmatprep.subr.bf16.mxu0 %v1509
    %1941 = vmatpush1.bf16.msra.mxu0 %v1508
    %1942 = vmatprep.subr.bf16.mxu0 %v1503
    %1943 = vmatpush1.bf16.msra.mxu0 %v1502
    %1944 = vmatprep.subr.bf16.mxu0 %v1497
    %1945 = vmatpush1.bf16.msra.mxu0 %v1496
    %1946 = vmatprep.subr.bf16.mxu0 %v1491
    %1947 = vmatpush1.bf16.msra.mxu0 %v1490
    %1948 = vmatprep.subr.bf16.mxu0 %v1485
    %1949 = vmatpush1.bf16.msra.mxu0 %v1484
    %1950 = vmatprep.subr.bf16.mxu0 %v1479
    %1951 = vmatpush1.bf16.msra.mxu0 %v1478
    %1952 = vmatprep.subr.bf16.mxu0 %v1473
    %1953 = vmatpush1.bf16.msra.mxu0 %v1472
    %1954 = vmatprep.subr.bf16.mxu0 %v1563
    %1955 = vmatpush2.bf16.msra.mxu0 %v1562
    %1956 = vmatprep.subr.bf16.mxu0 %v1557
    %1957 = vmatpush2.bf16.msra.mxu0 %v1556
    %1958 = vmatprep.subr.bf16.mxu0 %v1551
    %1959 = vmatpush2.bf16.msra.mxu0 %v1550
    %1960 = vmatprep.subr.bf16.mxu0 %v1545
    %1961 = vmatpush2.bf16.msra.mxu0 %v1544
    %1962 = vmatprep.subr.bf16.mxu0 %v1539
    %1963 = vmatpush2.bf16.msra.mxu0 %v1538
    %1964 = vmatprep.subr.bf16.mxu0 %v1533
    %1965 = vmatpush2.bf16.msra.mxu0 %v1532
    %1966 = vmatprep.subr.bf16.mxu0 %v1527
    %1967 = vmatpush2.bf16.msra.mxu0 %v1526
    %1968 = vmatprep.subr.bf16.mxu0 %v1521
    %1969 = vmatpush2.bf16.msra.mxu0 %v1520
    %1970 = vmatprep.mubr.bf16.mxu0 %v95
    %1971 = vmatmul.mubr.bf16.gmra.mxu0 %v94
    %v1972 = vpop.f32.mrf.mxu0
    %v1973 = vadd.f32 %v1932, %v1972
    %v1974 = vpop.f32.mrf.mxu0
    %v1975 = vadd.f32 %v1934, %v1974
    %v1976 = vpop.f32.mrf.mxu0
    %v1977 = vpop.f32.mrf.mxu0
    %1978 = vdwg.mxu0
    %1979 = vmatprep.subr.bf16.mxu0 %v1325
    %1980 = vmatpush1.bf16.msra.mxu0 %v1324
    %1981 = vmatprep.subr.bf16.mxu0 %v1319
    %1982 = vmatpush1.bf16.msra.mxu0 %v1318
    %1983 = vmatprep.subr.bf16.mxu0 %v1313
    %1984 = vmatpush1.bf16.msra.mxu0 %v1312
    %1985 = vmatprep.subr.bf16.mxu0 %v1307
    %1986 = vmatpush1.bf16.msra.mxu0 %v1306
    %1987 = vmatprep.subr.bf16.mxu0 %v1301
    %1988 = vmatpush1.bf16.msra.mxu0 %v1300
    %1989 = vmatprep.subr.bf16.mxu0 %v1295
    %1990 = vmatpush1.bf16.msra.mxu0 %v1294
    %1991 = vmatprep.subr.bf16.mxu0 %v1289
    %1992 = vmatpush1.bf16.msra.mxu0 %v1288
    %1993 = vmatprep.subr.bf16.mxu0 %v1283
    %1994 = vmatpush1.bf16.msra.mxu0 %v1282
    %1995 = vmatprep.subr.bf16.mxu0 %v1373
    %1996 = vmatpush2.bf16.msra.mxu0 %v1372
    %1997 = vmatprep.subr.bf16.mxu0 %v1367
    %1998 = vmatpush2.bf16.msra.mxu0 %v1366
    %1999 = vmatprep.subr.bf16.mxu0 %v1361
    %2000 = vmatpush2.bf16.msra.mxu0 %v1360
    %2001 = vmatprep.subr.bf16.mxu0 %v1355
    %2002 = vmatpush2.bf16.msra.mxu0 %v1354
    %2003 = vmatprep.subr.bf16.mxu0 %v1349
    %2004 = vmatpush2.bf16.msra.mxu0 %v1348
    %2005 = vmatprep.subr.bf16.mxu0 %v1343
    %2006 = vmatpush2.bf16.msra.mxu0 %v1342
    %2007 = vmatprep.subr.bf16.mxu0 %v1337
    %2008 = vmatpush2.bf16.msra.mxu0 %v1336
    %2009 = vmatprep.subr.bf16.mxu0 %v1331
    %2010 = vmatpush2.bf16.msra.mxu0 %v1330
    %2011 = vmatprep.mubr.bf16.mxu0 %v91
    %2012 = vmatmul.mubr.bf16.gmra.mxu0 %v90
    %v2013 = vpop.f32.mrf.mxu0
    %v2014 = vadd.f32 %v397, %v2013
    %v2015 = vpop.f32.mrf.mxu0
    %v2016 = vadd.f32 %v401, %v2015
    %v2017 = vpop.f32.mrf.mxu0
    %v2018 = vpop.f32.mrf.mxu0
    %2019 = vdwg.mxu0
    %2020 = vmatprep.subr.bf16.mxu0 %v1421
    %2021 = vmatpush1.bf16.msra.mxu0 %v1420
    %2022 = vmatprep.subr.bf16.mxu0 %v1415
    %2023 = vmatpush1.bf16.msra.mxu0 %v1414
    %2024 = vmatprep.subr.bf16.mxu0 %v1409
    %2025 = vmatpush1.bf16.msra.mxu0 %v1408
    %2026 = vmatprep.subr.bf16.mxu0 %v1403
    %2027 = vmatpush1.bf16.msra.mxu0 %v1402
    %2028 = vmatprep.subr.bf16.mxu0 %v1397
    %2029 = vmatpush1.bf16.msra.mxu0 %v1396
    %2030 = vmatprep.subr.bf16.mxu0 %v1391
    %2031 = vmatpush1.bf16.msra.mxu0 %v1390
    %2032 = vmatprep.subr.bf16.mxu0 %v1385
    %2033 = vmatpush1.bf16.msra.mxu0 %v1384
    %2034 = vmatprep.subr.bf16.mxu0 %v1379
    %2035 = vmatpush1.bf16.msra.mxu0 %v1378
    %2036 = vmatprep.subr.bf16.mxu0 %v1469
    %2037 = vmatpush2.bf16.msra.mxu0 %v1468
    %2038 = vmatprep.subr.bf16.mxu0 %v1463
    %2039 = vmatpush2.bf16.msra.mxu0 %v1462
    %2040 = vmatprep.subr.bf16.mxu0 %v1457
    %2041 = vmatpush2.bf16.msra.mxu0 %v1456
    %2042 = vmatprep.subr.bf16.mxu0 %v1451
    %2043 = vmatpush2.bf16.msra.mxu0 %v1450
    %2044 = vmatprep.subr.bf16.mxu0 %v1445
    %2045 = vmatpush2.bf16.msra.mxu0 %v1444
    %2046 = vmatprep.subr.bf16.mxu0 %v1439
    %2047 = vmatpush2.bf16.msra.mxu0 %v1438
    %2048 = vmatprep.subr.bf16.mxu0 %v1433
    %2049 = vmatpush2.bf16.msra.mxu0 %v1432
    %2050 = vmatprep.subr.bf16.mxu0 %v1427
    %2051 = vmatpush2.bf16.msra.mxu0 %v1426
    %2052 = vmatprep.mubr.bf16.mxu0 %v93
    %2053 = vmatmul.mubr.bf16.gmra.mxu0 %v92
    %v2054 = vpop.f32.mrf.mxu0
    %v2055 = vadd.f32 %v2014, %v2054
    %v2056 = vpop.f32.mrf.mxu0
    %v2057 = vadd.f32 %v2016, %v2056
    %v2058 = vpop.f32.mrf.mxu0
    %v2059 = vpop.f32.mrf.mxu0
    %2060 = vdwg.mxu0
    %2061 = vmatprep.subr.bf16.mxu0 %v1517
    %2062 = vmatpush1.bf16.msra.mxu0 %v1516
    %2063 = vmatprep.subr.bf16.mxu0 %v1511
    %2064 = vmatpush1.bf16.msra.mxu0 %v1510
    %2065 = vmatprep.subr.bf16.mxu0 %v1505
    %2066 = vmatpush1.bf16.msra.mxu0 %v1504
    %2067 = vmatprep.subr.bf16.mxu0 %v1499
    %2068 = vmatpush1.bf16.msra.mxu0 %v1498
    %2069 = vmatprep.subr.bf16.mxu0 %v1493
    %2070 = vmatpush1.bf16.msra.mxu0 %v1492
    %2071 = vmatprep.subr.bf16.mxu0 %v1487
    %2072 = vmatpush1.bf16.msra.mxu0 %v1486
    %2073 = vmatprep.subr.bf16.mxu0 %v1481
    %2074 = vmatpush1.bf16.msra.mxu0 %v1480
    %2075 = vmatprep.subr.bf16.mxu0 %v1475
    %2076 = vmatpush1.bf16.msra.mxu0 %v1474
    %2077 = vmatprep.subr.bf16.mxu0 %v1565
    %2078 = vmatpush2.bf16.msra.mxu0 %v1564
    %2079 = vmatprep.subr.bf16.mxu0 %v1559
    %2080 = vmatpush2.bf16.msra.mxu0 %v1558
    %2081 = vmatprep.subr.bf16.mxu0 %v1553
    %2082 = vmatpush2.bf16.msra.mxu0 %v1552
    %2083 = vmatprep.subr.bf16.mxu0 %v1547
    %2084 = vmatpush2.bf16.msra.mxu0 %v1546
    %2085 = vmatprep.subr.bf16.mxu0 %v1541
    %2086 = vmatpush2.bf16.msra.mxu0 %v1540
    %2087 = vmatprep.subr.bf16.mxu0 %v1535
    %2088 = vmatpush2.bf16.msra.mxu0 %v1534
    %2089 = vmatprep.subr.bf16.mxu0 %v1529
    %2090 = vmatpush2.bf16.msra.mxu0 %v1528
    %2091 = vmatprep.subr.bf16.mxu0 %v1523
    %2092 = vmatpush2.bf16.msra.mxu0 %v1522
    %2093 = vmatprep.mubr.bf16.mxu0 %v95
    %2094 = vmatmul.mubr.bf16.gmra.mxu0 %v94
    %v2095 = vpop.f32.mrf.mxu0
    %v2096 = vadd.f32 %v2055, %v2095
    %v2097 = vpop.f32.mrf.mxu0
    %v2098 = vadd.f32 %v2057, %v2097
    %v2099 = vpop.f32.mrf.mxu0
    %v2100 = vpop.f32.mrf.mxu0
    %2101 = vdwg.mxu0
    %2102 = vmatprep.subr.bf16.mxu0 %v1327
    %2103 = vmatpush1.bf16.msra.mxu0 %v1326
    %2104 = vmatprep.subr.bf16.mxu0 %v1321
    %2105 = vmatpush1.bf16.msra.mxu0 %v1320
    %2106 = vmatprep.subr.bf16.mxu0 %v1315
    %2107 = vmatpush1.bf16.msra.mxu0 %v1314
    %2108 = vmatprep.subr.bf16.mxu0 %v1309
    %2109 = vmatpush1.bf16.msra.mxu0 %v1308
    %2110 = vmatprep.subr.bf16.mxu0 %v1303
    %2111 = vmatpush1.bf16.msra.mxu0 %v1302
    %2112 = vmatprep.subr.bf16.mxu0 %v1297
    %2113 = vmatpush1.bf16.msra.mxu0 %v1296
    %2114 = vmatprep.subr.bf16.mxu0 %v1291
    %2115 = vmatpush1.bf16.msra.mxu0 %v1290
    %2116 = vmatprep.subr.bf16.mxu0 %v1285
    %2117 = vmatpush1.bf16.msra.mxu0 %v1284
    %2118 = vmatprep.subr.bf16.mxu0 %v1375
    %2119 = vmatpush2.bf16.msra.mxu0 %v1374
    %2120 = vmatprep.subr.bf16.mxu0 %v1369
    %2121 = vmatpush2.bf16.msra.mxu0 %v1368
    %2122 = vmatprep.subr.bf16.mxu0 %v1363
    %2123 = vmatpush2.bf16.msra.mxu0 %v1362
    %2124 = vmatprep.subr.bf16.mxu0 %v1357
    %2125 = vmatpush2.bf16.msra.mxu0 %v1356
    %2126 = vmatprep.subr.bf16.mxu0 %v1351
    %2127 = vmatpush2.bf16.msra.mxu0 %v1350
    %2128 = vmatprep.subr.bf16.mxu0 %v1345
    %2129 = vmatpush2.bf16.msra.mxu0 %v1344
    %2130 = vmatprep.subr.bf16.mxu0 %v1339
    %2131 = vmatpush2.bf16.msra.mxu0 %v1338
    %2132 = vmatprep.subr.bf16.mxu0 %v1333
    %2133 = vmatpush2.bf16.msra.mxu0 %v1332
    %2134 = vmatprep.mubr.bf16.mxu0 %v91
    %2135 = vmatmul.mubr.bf16.gmra.mxu0 %v90
    %v2136 = vpop.f32.mrf.mxu0
    %v2137 = vadd.f32 %v405, %v2136
    %v2138 = vpop.f32.mrf.mxu0
    %v2139 = vadd.f32 %v409, %v2138
    %v2140 = vpop.f32.mrf.mxu0
    %v2141 = vpop.f32.mrf.mxu0
    %2142 = vdwg.mxu0
    %2143 = vmatprep.subr.bf16.mxu0 %v1423
    %2144 = vmatpush1.bf16.msra.mxu0 %v1422
    %2145 = vmatprep.subr.bf16.mxu0 %v1417
    %2146 = vmatpush1.bf16.msra.mxu0 %v1416
    %2147 = vmatprep.subr.bf16.mxu0 %v1411
    %2148 = vmatpush1.bf16.msra.mxu0 %v1410
    %2149 = vmatprep.subr.bf16.mxu0 %v1405
    %2150 = vmatpush1.bf16.msra.mxu0 %v1404
    %2151 = vmatprep.subr.bf16.mxu0 %v1399
    %2152 = vmatpush1.bf16.msra.mxu0 %v1398
    %2153 = vmatprep.subr.bf16.mxu0 %v1393
    %2154 = vmatpush1.bf16.msra.mxu0 %v1392
    %2155 = vmatprep.subr.bf16.mxu0 %v1387
    %2156 = vmatpush1.bf16.msra.mxu0 %v1386
    %2157 = vmatprep.subr.bf16.mxu0 %v1381
    %2158 = vmatpush1.bf16.msra.mxu0 %v1380
    %2159 = vmatprep.subr.bf16.mxu0 %v1471
    %2160 = vmatpush2.bf16.msra.mxu0 %v1470
    %2161 = vmatprep.subr.bf16.mxu0 %v1465
    %2162 = vmatpush2.bf16.msra.mxu0 %v1464
    %2163 = vmatprep.subr.bf16.mxu0 %v1459
    %2164 = vmatpush2.bf16.msra.mxu0 %v1458
    %2165 = vmatprep.subr.bf16.mxu0 %v1453
    %2166 = vmatpush2.bf16.msra.mxu0 %v1452
    %2167 = vmatprep.subr.bf16.mxu0 %v1447
    %2168 = vmatpush2.bf16.msra.mxu0 %v1446
    %2169 = vmatprep.subr.bf16.mxu0 %v1441
    %2170 = vmatpush2.bf16.msra.mxu0 %v1440
    %2171 = vmatprep.subr.bf16.mxu0 %v1435
    %2172 = vmatpush2.bf16.msra.mxu0 %v1434
    %2173 = vmatprep.subr.bf16.mxu0 %v1429
    %2174 = vmatpush2.bf16.msra.mxu0 %v1428
    %2175 = vmatprep.mubr.bf16.mxu0 %v93
    %2176 = vmatmul.mubr.bf16.gmra.mxu0 %v92
    %v2177 = vpop.f32.mrf.mxu0
    %v2178 = vadd.f32 %v2137, %v2177
    %v2179 = vpop.f32.mrf.mxu0
    %v2180 = vadd.f32 %v2139, %v2179
    %v2181 = vpop.f32.mrf.mxu0
    %v2182 = vpop.f32.mrf.mxu0
    %2183 = vdwg.mxu0
    %2184 = vmatprep.subr.bf16.mxu0 %v1519
    %2185 = vmatpush1.bf16.msra.mxu0 %v1518
    %2186 = vmatprep.subr.bf16.mxu0 %v1513
    %2187 = vmatpush1.bf16.msra.mxu0 %v1512
    %2188 = vmatprep.subr.bf16.mxu0 %v1507
    %2189 = vmatpush1.bf16.msra.mxu0 %v1506
    %2190 = vmatprep.subr.bf16.mxu0 %v1501
    %2191 = vmatpush1.bf16.msra.mxu0 %v1500
    %2192 = vmatprep.subr.bf16.mxu0 %v1495
    %2193 = vmatpush1.bf16.msra.mxu0 %v1494
    %2194 = vmatprep.subr.bf16.mxu0 %v1489
    %2195 = vmatpush1.bf16.msra.mxu0 %v1488
    %2196 = vmatprep.subr.bf16.mxu0 %v1483
    %2197 = vmatpush1.bf16.msra.mxu0 %v1482
    %2198 = vmatprep.subr.bf16.mxu0 %v1477
    %2199 = vmatpush1.bf16.msra.mxu0 %v1476
    %2200 = vmatprep.subr.bf16.mxu0 %v1567
    %2201 = vmatpush2.bf16.msra.mxu0 %v1566
    %2202 = vmatprep.subr.bf16.mxu0 %v1561
    %2203 = vmatpush2.bf16.msra.mxu0 %v1560
    %2204 = vmatprep.subr.bf16.mxu0 %v1555
    %2205 = vmatpush2.bf16.msra.mxu0 %v1554
    %2206 = vmatprep.subr.bf16.mxu0 %v1549
    %2207 = vmatpush2.bf16.msra.mxu0 %v1548
    %2208 = vmatprep.subr.bf16.mxu0 %v1543
    %2209 = vmatpush2.bf16.msra.mxu0 %v1542
    %2210 = vmatprep.subr.bf16.mxu0 %v1537
    %2211 = vmatpush2.bf16.msra.mxu0 %v1536
    %2212 = vmatprep.subr.bf16.mxu0 %v1531
    %2213 = vmatpush2.bf16.msra.mxu0 %v1530
    %2214 = vmatprep.subr.bf16.mxu0 %v1525
    %2215 = vmatpush2.bf16.msra.mxu0 %v1524
    %2216 = vmatprep.mubr.bf16.mxu0 %v95
    %2217 = vmatmul.mubr.bf16.gmra.mxu0 %v94
    %v2218 = vpop.f32.mrf.mxu0
    %v2219 = vadd.f32 %v2178, %v2218
    %v2220 = vpop.f32.mrf.mxu0
    %v2221 = vadd.f32 %v2180, %v2220
    %v2222 = vpop.f32.mrf.mxu0
    %v2223 = vpop.f32.mrf.mxu0
    %2224 = vdwg.mxu0
    %v2225 = vpack.c.bf16 %v1973, %v1973
    %v2226 = vpack.c.bf16 %v1975, %v1975
    %v2227 = vpack.c.bf16 %v2096, %v2096
    %v2228 = vpack.c.bf16 %v2098, %v2098
    %v2229 = vpack.c.bf16 %v2219, %v2219
    %v2230 = vpack.c.bf16 %v2221, %v2221
    %v2231 = vtanh.bf16.pop %v2225
    %v2232 = vtanh.bf16.pop %v2226
    %v2233 = vtanh.bf16.pop %v2227
    %v2234 = vtanh.bf16.pop %v2228
    %v2235 = vtanh.bf16.pop %v2229
    %v2236 = vtanh.bf16.pop %v2230
    %v2237 = vld [vmem:[#allocation8] sm:$0xf]
    %v2238 = vld [vmem:[#allocation8 + $0x4] sm:$0xf]
    %v2239 = vld [vmem:[#allocation8 + $0x8] sm:$0xf]
    %v2240 = vld [vmem:[#allocation8 + $0xc] sm:$0xf]
    %v2241 = vld [vmem:[#allocation8 + $0x10] sm:$0xf]
    %v2242 = vld [vmem:[#allocation8 + $0x14] sm:$0xf]
    %v2243 = vld [vmem:[#allocation8 + $0x18] sm:$0xf]
    %v2244 = vld [vmem:[#allocation8 + $0x1c] sm:$0xf]
    %v2245 = vld [vmem:[#allocation8 + $0x20] sm:$0xf]
    %v2246 = vld [vmem:[#allocation8 + $0x24] sm:$0xf]
    %v2247 = vld [vmem:[#allocation8 + $0x28] sm:$0xf]
    %v2248 = vld [vmem:[#allocation8 + $0x2c] sm:$0xf]
    %v2249 = vld [vmem:[#allocation8 + $0x30] sm:$0xf]
    %v2250 = vld [vmem:[#allocation8 + $0x34] sm:$0xf]
    %v2251 = vld [vmem:[#allocation8 + $0x38] sm:$0xf]
    %v2252 = vld [vmem:[#allocation8 + $0x3c] sm:$0xf]
    %v2253 = vld [vmem:[#allocation8 + $0x40] sm:$0xf]
    %v2254 = vld [vmem:[#allocation8 + $0x44] sm:$0xf]
    %v2255 = vld [vmem:[#allocation8 + $0x48] sm:$0xf]
    %v2256 = vld [vmem:[#allocation8 + $0x4c] sm:$0xf]
    %v2257 = vld [vmem:[#allocation8 + $0x50] sm:$0xf]
    %v2258 = vld [vmem:[#allocation8 + $0x54] sm:$0xf]
    %v2259 = vld [vmem:[#allocation8 + $0x58] sm:$0xf]
    %v2260 = vld [vmem:[#allocation8 + $0x5c] sm:$0xf]
    %v2261 = vld [vmem:[#allocation8 + $0x60] sm:$0xf]
    %v2262 = vld [vmem:[#allocation8 + $0x64] sm:$0xf]
    %v2263 = vld [vmem:[#allocation8 + $0x68] sm:$0xf]
    %v2264 = vld [vmem:[#allocation8 + $0x6c] sm:$0xf]
    %v2265 = vld [vmem:[#allocation8 + $0x70] sm:$0xf]
    %v2266 = vld [vmem:[#allocation8 + $0x74] sm:$0xf]
    %v2267 = vld [vmem:[#allocation8 + $0x78] sm:$0xf]
    %v2268 = vld [vmem:[#allocation8 + $0x7c] sm:$0xf]
    %v2269 = vld [vmem:[#allocation8 + $0x80] sm:$0xf]
    %v2270 = vld [vmem:[#allocation8 + $0x84] sm:$0xf]
    %v2271 = vld [vmem:[#allocation8 + $0x88] sm:$0xf]
    %v2272 = vld [vmem:[#allocation8 + $0x8c] sm:$0xf]
    %v2273 = vld [vmem:[#allocation8 + $0x90] sm:$0xf]
    %v2274 = vld [vmem:[#allocation8 + $0x94] sm:$0xf]
    %v2275 = vld [vmem:[#allocation8 + $0x98] sm:$0xf]
    %v2276 = vld [vmem:[#allocation8 + $0x9c] sm:$0xf]
    %v2277 = vld [vmem:[#allocation8 + $0xa0] sm:$0xf]
    %v2278 = vld [vmem:[#allocation8 + $0xa4] sm:$0xf]
    %v2279 = vld [vmem:[#allocation8 + $0xa8] sm:$0xf]
    %v2280 = vld [vmem:[#allocation8 + $0xac] sm:$0xf]
    %v2281 = vld [vmem:[#allocation8 + $0xb0] sm:$0xf]
    %v2282 = vld [vmem:[#allocation8 + $0xb4] sm:$0xf]
    %v2283 = vld [vmem:[#allocation8 + $0xb8] sm:$0xf]
    %v2284 = vld [vmem:[#allocation8 + $0xbc] sm:$0xf]
    %v2285 = vld [vmem:[#allocation8 + $0xc0] sm:$0xf]
    %v2286 = vld [vmem:[#allocation8 + $0xc4] sm:$0xf]
    %v2287 = vld [vmem:[#allocation8 + $0xc8] sm:$0xf]
    %v2288 = vld [vmem:[#allocation8 + $0xcc] sm:$0xf]
    %v2289 = vld [vmem:[#allocation8 + $0xd0] sm:$0xf]
    %v2290 = vld [vmem:[#allocation8 + $0xd4] sm:$0xf]
    %v2291 = vld [vmem:[#allocation8 + $0xd8] sm:$0xf]
    %v2292 = vld [vmem:[#allocation8 + $0xdc] sm:$0xf]
    %v2293 = vld [vmem:[#allocation8 + $0xe0] sm:$0xf]
    %v2294 = vld [vmem:[#allocation8 + $0xe4] sm:$0xf]
    %v2295 = vld [vmem:[#allocation8 + $0xe8] sm:$0xf]
    %v2296 = vld [vmem:[#allocation8 + $0xec] sm:$0xf]
    %v2297 = vld [vmem:[#allocation8 + $0xf0] sm:$0xf]
    %v2298 = vld [vmem:[#allocation8 + $0xf4] sm:$0xf]
    %v2299 = vld [vmem:[#allocation8 + $0xf8] sm:$0xf]
    %v2300 = vld [vmem:[#allocation8 + $0xfc] sm:$0xf]
    %v2301 = vld [vmem:[#allocation8 + $0x100] sm:$0xf]
    %v2302 = vld [vmem:[#allocation8 + $0x104] sm:$0xf]
    %v2303 = vld [vmem:[#allocation8 + $0x108] sm:$0xf]
    %v2304 = vld [vmem:[#allocation8 + $0x10c] sm:$0xf]
    %v2305 = vld [vmem:[#allocation8 + $0x110] sm:$0xf]
    %v2306 = vld [vmem:[#allocation8 + $0x114] sm:$0xf]
    %v2307 = vld [vmem:[#allocation8 + $0x118] sm:$0xf]
    %v2308 = vld [vmem:[#allocation8 + $0x11c] sm:$0xf]
    %v2309 = vld [vmem:[#allocation8 + $0x120] sm:$0xf]
    %v2310 = vld [vmem:[#allocation8 + $0x124] sm:$0xf]
    %v2311 = vld [vmem:[#allocation8 + $0x128] sm:$0xf]
    %v2312 = vld [vmem:[#allocation8 + $0x12c] sm:$0xf]
    %v2313 = vld [vmem:[#allocation8 + $0x130] sm:$0xf]
    %v2314 = vld [vmem:[#allocation8 + $0x134] sm:$0xf]
    %v2315 = vld [vmem:[#allocation8 + $0x138] sm:$0xf]
    %v2316 = vld [vmem:[#allocation8 + $0x13c] sm:$0xf]
    %v2317 = vld [vmem:[#allocation8 + $0x140] sm:$0xf]
    %v2318 = vld [vmem:[#allocation8 + $0x144] sm:$0xf]
    %v2319 = vld [vmem:[#allocation8 + $0x148] sm:$0xf]
    %v2320 = vld [vmem:[#allocation8 + $0x14c] sm:$0xf]
    %v2321 = vld [vmem:[#allocation8 + $0x150] sm:$0xf]
    %v2322 = vld [vmem:[#allocation8 + $0x154] sm:$0xf]
    %v2323 = vld [vmem:[#allocation8 + $0x158] sm:$0xf]
    %v2324 = vld [vmem:[#allocation8 + $0x15c] sm:$0xf]
    %v2325 = vld [vmem:[#allocation8 + $0x160] sm:$0xf]
    %v2326 = vld [vmem:[#allocation8 + $0x164] sm:$0xf]
    %v2327 = vld [vmem:[#allocation8 + $0x168] sm:$0xf]
    %v2328 = vld [vmem:[#allocation8 + $0x16c] sm:$0xf]
    %v2329 = vld [vmem:[#allocation8 + $0x170] sm:$0xf]
    %v2330 = vld [vmem:[#allocation8 + $0x174] sm:$0xf]
    %v2331 = vld [vmem:[#allocation8 + $0x178] sm:$0xf]
    %v2332 = vld [vmem:[#allocation8 + $0x17c] sm:$0xf]
    %v2333 = vld [vmem:[#allocation10] sm:$0x1]
    %v2335 = vlaneseq
    %v2336 = vshrl.u32 %v2335, 7
    %v2337 = vsub.s32 0, %v2336
    %v2338 = vrot.slane %v2333, %v2337
    %v2436 = vunpack.c.l.b16 %v2237
    %v2437 = vunpack.c.l.b16 %v2238
    %v2438 = vunpack.c.l.b16 %v2239
    %v2439 = vunpack.c.l.b16 %v2240
    %v2440 = vunpack.c.l.b16 %v2241
    %v2441 = vunpack.c.l.b16 %v2242
    %v2442 = vunpack.c.l.b16 %v2243
    %v2443 = vunpack.c.l.b16 %v2244
    %v2444 = vunpack.c.l.b16 %v2245
    %v2445 = vunpack.c.l.b16 %v2246
    %v2446 = vunpack.c.l.b16 %v2247
    %v2447 = vunpack.c.l.b16 %v2248
    %v2448 = vunpack.c.l.b16 %v2249
    %v2449 = vunpack.c.l.b16 %v2250
    %v2450 = vunpack.c.l.b16 %v2251
    %v2451 = vunpack.c.l.b16 %v2252
    %v2452 = vunpack.c.l.b16 %v2253
    %v2453 = vunpack.c.l.b16 %v2254
    %v2454 = vunpack.c.l.b16 %v2255
    %v2455 = vunpack.c.l.b16 %v2256
    %v2456 = vunpack.c.l.b16 %v2257
    %v2457 = vunpack.c.l.b16 %v2258
    %v2458 = vunpack.c.l.b16 %v2259
    %v2459 = vunpack.c.l.b16 %v2260
    %v2460 = vunpack.c.l.b16 %v2261
    %v2461 = vunpack.c.l.b16 %v2262
    %v2462 = vunpack.c.l.b16 %v2263
    %v2463 = vunpack.c.l.b16 %v2264
    %v2464 = vunpack.c.l.b16 %v2265
    %v2465 = vunpack.c.l.b16 %v2266
    %v2466 = vunpack.c.l.b16 %v2267
    %v2467 = vunpack.c.l.b16 %v2268
    %v2468 = vunpack.c.l.b16 %v2269
    %v2469 = vunpack.c.l.b16 %v2270
    %v2470 = vunpack.c.l.b16 %v2271
    %v2471 = vunpack.c.l.b16 %v2272
    %v2472 = vunpack.c.l.b16 %v2273
    %v2473 = vunpack.c.l.b16 %v2274
    %v2474 = vunpack.c.l.b16 %v2275
    %v2475 = vunpack.c.l.b16 %v2276
    %v2476 = vunpack.c.l.b16 %v2277
    %v2477 = vunpack.c.l.b16 %v2278
    %v2478 = vunpack.c.l.b16 %v2279
    %v2479 = vunpack.c.l.b16 %v2280
    %v2480 = vunpack.c.l.b16 %v2281
    %v2481 = vunpack.c.l.b16 %v2282
    %v2482 = vunpack.c.l.b16 %v2283
    %v2483 = vunpack.c.l.b16 %v2284
    %v2484 = vunpack.c.l.b16 %v2285
    %v2485 = vunpack.c.l.b16 %v2286
    %v2486 = vunpack.c.l.b16 %v2287
    %v2487 = vunpack.c.l.b16 %v2288
    %v2488 = vunpack.c.l.b16 %v2289
    %v2489 = vunpack.c.l.b16 %v2290
    %v2490 = vunpack.c.l.b16 %v2291
    %v2491 = vunpack.c.l.b16 %v2292
    %v2492 = vunpack.c.l.b16 %v2293
    %v2493 = vunpack.c.l.b16 %v2294
    %v2494 = vunpack.c.l.b16 %v2295
    %v2495 = vunpack.c.l.b16 %v2296
    %v2496 = vunpack.c.l.b16 %v2297
    %v2497 = vunpack.c.l.b16 %v2298
    %v2498 = vunpack.c.l.b16 %v2299
    %v2499 = vunpack.c.l.b16 %v2300
    %v2500 = vunpack.c.l.b16 %v2301
    %v2501 = vunpack.c.l.b16 %v2302
    %v2502 = vunpack.c.l.b16 %v2303
    %v2503 = vunpack.c.l.b16 %v2304
    %v2504 = vunpack.c.l.b16 %v2305
    %v2505 = vunpack.c.l.b16 %v2306
    %v2506 = vunpack.c.l.b16 %v2307
    %v2507 = vunpack.c.l.b16 %v2308
    %v2508 = vunpack.c.l.b16 %v2309
    %v2509 = vunpack.c.l.b16 %v2310
    %v2510 = vunpack.c.l.b16 %v2311
    %v2511 = vunpack.c.l.b16 %v2312
    %v2512 = vunpack.c.l.b16 %v2313
    %v2513 = vunpack.c.l.b16 %v2314
    %v2514 = vunpack.c.l.b16 %v2315
    %v2515 = vunpack.c.l.b16 %v2316
    %v2516 = vunpack.c.l.b16 %v2317
    %v2517 = vunpack.c.l.b16 %v2318
    %v2518 = vunpack.c.l.b16 %v2319
    %v2519 = vunpack.c.l.b16 %v2320
    %v2520 = vunpack.c.l.b16 %v2321
    %v2521 = vunpack.c.l.b16 %v2322
    %v2522 = vunpack.c.l.b16 %v2323
    %v2523 = vunpack.c.l.b16 %v2324
    %v2524 = vunpack.c.l.b16 %v2325
    %v2525 = vunpack.c.l.b16 %v2326
    %v2526 = vunpack.c.l.b16 %v2327
    %v2527 = vunpack.c.l.b16 %v2328
    %v2528 = vunpack.c.l.b16 %v2329
    %v2529 = vunpack.c.l.b16 %v2330
    %v2530 = vunpack.c.l.b16 %v2331
    %v2531 = vunpack.c.l.b16 %v2332
    %v2532 = vpack.c.b16 %v2437, %v2436
    %v2533 = vpack.c.b16 %v2439, %v2438
    %v2534 = vpack.c.b16 %v2441, %v2440
    %v2535 = vpack.c.b16 %v2443, %v2442
    %v2536 = vpack.c.b16 %v2445, %v2444
    %v2537 = vpack.c.b16 %v2447, %v2446
    %v2538 = vpack.c.b16 %v2449, %v2448
    %v2539 = vpack.c.b16 %v2451, %v2450
    %v2540 = vpack.c.b16 %v2453, %v2452
    %v2541 = vpack.c.b16 %v2455, %v2454
    %v2542 = vpack.c.b16 %v2457, %v2456
    %v2543 = vpack.c.b16 %v2459, %v2458
    %v2544 = vpack.c.b16 %v2461, %v2460
    %v2545 = vpack.c.b16 %v2463, %v2462
    %v2546 = vpack.c.b16 %v2465, %v2464
    %v2547 = vpack.c.b16 %v2467, %v2466
    %v2548 = vpack.c.b16 %v2469, %v2468
    %v2549 = vpack.c.b16 %v2471, %v2470
    %v2550 = vpack.c.b16 %v2473, %v2472
    %v2551 = vpack.c.b16 %v2475, %v2474
    %v2552 = vpack.c.b16 %v2477, %v2476
    %v2553 = vpack.c.b16 %v2479, %v2478
    %v2554 = vpack.c.b16 %v2481, %v2480
    %v2555 = vpack.c.b16 %v2483, %v2482
    %v2556 = vpack.c.b16 %v2485, %v2484
    %v2557 = vpack.c.b16 %v2487, %v2486
    %v2558 = vpack.c.b16 %v2489, %v2488
    %v2559 = vpack.c.b16 %v2491, %v2490
    %v2560 = vpack.c.b16 %v2493, %v2492
    %v2561 = vpack.c.b16 %v2495, %v2494
    %v2562 = vpack.c.b16 %v2497, %v2496
    %v2563 = vpack.c.b16 %v2499, %v2498
    %v2564 = vpack.c.b16 %v2501, %v2500
    %v2565 = vpack.c.b16 %v2503, %v2502
    %v2566 = vpack.c.b16 %v2505, %v2504
    %v2567 = vpack.c.b16 %v2507, %v2506
    %v2568 = vpack.c.b16 %v2509, %v2508
    %v2569 = vpack.c.b16 %v2511, %v2510
    %v2570 = vpack.c.b16 %v2513, %v2512
    %v2571 = vpack.c.b16 %v2515, %v2514
    %v2572 = vpack.c.b16 %v2517, %v2516
    %v2573 = vpack.c.b16 %v2519, %v2518
    %v2574 = vpack.c.b16 %v2521, %v2520
    %v2575 = vpack.c.b16 %v2523, %v2522
    %v2576 = vpack.c.b16 %v2525, %v2524
    %v2577 = vpack.c.b16 %v2527, %v2526
    %v2578 = vpack.c.b16 %v2529, %v2528
    %v2579 = vpack.c.b16 %v2531, %v2530
    %2628 = vmatprep.subr.bf16.mxu0 0
    %2629 = vmatpush1.bf16.msra.mxu0 %v2539
    %2630 = vmatprep.subr.bf16.mxu0 0
    %2631 = vmatpush1.bf16.msra.mxu0 %v2538
    %2632 = vmatprep.subr.bf16.mxu0 0
    %2633 = vmatpush1.bf16.msra.mxu0 %v2537
    %2634 = vmatprep.subr.bf16.mxu0 0
    %2635 = vmatpush1.bf16.msra.mxu0 %v2536
    %2636 = vmatprep.subr.bf16.mxu0 0
    %2637 = vmatpush1.bf16.msra.mxu0 %v2535
    %2638 = vmatprep.subr.bf16.mxu0 0
    %2639 = vmatpush1.bf16.msra.mxu0 %v2534
    %2640 = vmatprep.subr.bf16.mxu0 0
    %2641 = vmatpush1.bf16.msra.mxu0 %v2533
    %2642 = vmatprep.subr.bf16.mxu0 0
    %2643 = vmatpush1.bf16.msra.mxu0 %v2532
    %2644 = vmatprep.subr.bf16.mxu0 0
    %2645 = vmatpush2.bf16.msra.mxu0 %v2547
    %2646 = vmatprep.subr.bf16.mxu0 0
    %2647 = vmatpush2.bf16.msra.mxu0 %v2546
    %2648 = vmatprep.subr.bf16.mxu0 0
    %2649 = vmatpush2.bf16.msra.mxu0 %v2545
    %2650 = vmatprep.subr.bf16.mxu0 0
    %2651 = vmatpush2.bf16.msra.mxu0 %v2544
    %2652 = vmatprep.subr.bf16.mxu0 0
    %2653 = vmatpush2.bf16.msra.mxu0 %v2543
    %2654 = vmatprep.subr.bf16.mxu0 0
    %2655 = vmatpush2.bf16.msra.mxu0 %v2542
    %2656 = vmatprep.subr.bf16.mxu0 0
    %2657 = vmatpush2.bf16.msra.mxu0 %v2541
    %2658 = vmatprep.subr.bf16.mxu0 0
    %2659 = vmatpush2.bf16.msra.mxu0 %v2540
    %2660 = vmatprep.mubr.bf16.mxu0 %v2232
    %2661 = vmatmul.mubr.bf16.gmra.mxu0 %v2231
    %v2662 = vpop.f32.mrf.mxu0
    %v2663 = vadd.f32 %v2338, %v2662
    %v2664 = vpop.f32.mrf.mxu0
    %v2665 = vpop.f32.mrf.mxu0
    %v2666 = vpop.f32.mrf.mxu0
    %2667 = vdwg.mxu0
    %2668 = vmatprep.subr.bf16.mxu0 0
    %2669 = vmatpush1.bf16.msra.mxu0 %v2555
    %2670 = vmatprep.subr.bf16.mxu0 0
    %2671 = vmatpush1.bf16.msra.mxu0 %v2554
    %2672 = vmatprep.subr.bf16.mxu0 0
    %2673 = vmatpush1.bf16.msra.mxu0 %v2553
    %2674 = vmatprep.subr.bf16.mxu0 0
    %2675 = vmatpush1.bf16.msra.mxu0 %v2552
    %2676 = vmatprep.subr.bf16.mxu0 0
    %2677 = vmatpush1.bf16.msra.mxu0 %v2551
    %2678 = vmatprep.subr.bf16.mxu0 0
    %2679 = vmatpush1.bf16.msra.mxu0 %v2550
    %2680 = vmatprep.subr.bf16.mxu0 0
    %2681 = vmatpush1.bf16.msra.mxu0 %v2549
    %2682 = vmatprep.subr.bf16.mxu0 0
    %2683 = vmatpush1.bf16.msra.mxu0 %v2548
    %2684 = vmatprep.subr.bf16.mxu0 0
    %2685 = vmatpush2.bf16.msra.mxu0 %v2563
    %2686 = vmatprep.subr.bf16.mxu0 0
    %2687 = vmatpush2.bf16.msra.mxu0 %v2562
    %2688 = vmatprep.subr.bf16.mxu0 0
    %2689 = vmatpush2.bf16.msra.mxu0 %v2561
    %2690 = vmatprep.subr.bf16.mxu0 0
    %2691 = vmatpush2.bf16.msra.mxu0 %v2560
    %2692 = vmatprep.subr.bf16.mxu0 0
    %2693 = vmatpush2.bf16.msra.mxu0 %v2559
    %2694 = vmatprep.subr.bf16.mxu0 0
    %2695 = vmatpush2.bf16.msra.mxu0 %v2558
    %2696 = vmatprep.subr.bf16.mxu0 0
    %2697 = vmatpush2.bf16.msra.mxu0 %v2557
    %2698 = vmatprep.subr.bf16.mxu0 0
    %2699 = vmatpush2.bf16.msra.mxu0 %v2556
    %2700 = vmatprep.mubr.bf16.mxu0 %v2234
    %2701 = vmatmul.mubr.bf16.gmra.mxu0 %v2233
    %v2702 = vpop.f32.mrf.mxu0
    %v2703 = vadd.f32 %v2663, %v2702
    %v2704 = vpop.f32.mrf.mxu0
    %v2705 = vpop.f32.mrf.mxu0
    %v2706 = vpop.f32.mrf.mxu0
    %2707 = vdwg.mxu0
    %2708 = vmatprep.subr.bf16.mxu0 0
    %2709 = vmatpush1.bf16.msra.mxu0 %v2571
    %2710 = vmatprep.subr.bf16.mxu0 0
    %2711 = vmatpush1.bf16.msra.mxu0 %v2570
    %2712 = vmatprep.subr.bf16.mxu0 0
    %2713 = vmatpush1.bf16.msra.mxu0 %v2569
    %2714 = vmatprep.subr.bf16.mxu0 0
    %2715 = vmatpush1.bf16.msra.mxu0 %v2568
    %2716 = vmatprep.subr.bf16.mxu0 0
    %2717 = vmatpush1.bf16.msra.mxu0 %v2567
    %2718 = vmatprep.subr.bf16.mxu0 0
    %2719 = vmatpush1.bf16.msra.mxu0 %v2566
    %2720 = vmatprep.subr.bf16.mxu0 0
    %2721 = vmatpush1.bf16.msra.mxu0 %v2565
    %2722 = vmatprep.subr.bf16.mxu0 0
    %2723 = vmatpush1.bf16.msra.mxu0 %v2564
    %2724 = vmatprep.subr.bf16.mxu0 0
    %2725 = vmatpush2.bf16.msra.mxu0 %v2579
    %2726 = vmatprep.subr.bf16.mxu0 0
    %2727 = vmatpush2.bf16.msra.mxu0 %v2578
    %2728 = vmatprep.subr.bf16.mxu0 0
    %2729 = vmatpush2.bf16.msra.mxu0 %v2577
    %2730 = vmatprep.subr.bf16.mxu0 0
    %2731 = vmatpush2.bf16.msra.mxu0 %v2576
    %2732 = vmatprep.subr.bf16.mxu0 0
    %2733 = vmatpush2.bf16.msra.mxu0 %v2575
    %2734 = vmatprep.subr.bf16.mxu0 0
    %2735 = vmatpush2.bf16.msra.mxu0 %v2574
    %2736 = vmatprep.subr.bf16.mxu0 0
    %2737 = vmatpush2.bf16.msra.mxu0 %v2573
    %2738 = vmatprep.subr.bf16.mxu0 0
    %2739 = vmatpush2.bf16.msra.mxu0 %v2572
    %2740 = vmatprep.mubr.bf16.mxu0 %v2236
    %2741 = vmatmul.mubr.bf16.gmra.mxu0 %v2235
    %v2742 = vpop.f32.mrf.mxu0
    %v2743 = vadd.f32 %v2703, %v2742
    %v2744 = vpop.f32.mrf.mxu0
    %v2745 = vpop.f32.mrf.mxu0
    %v2746 = vpop.f32.mrf.mxu0
    %2747 = vdwg.mxu0
    %2748 = vmax.xlane.f32.xlu0 %v2743
    %v2749 = vpop.xlane.xlu0 %2748
    %v2750 = vsub.f32 %v2743, %v2749
    %v2751 = vmul.f32 %v2750, 1.442695
    %v2752 = vpow.pop %v2751
    %2753 = vadd.xlane.f32.xlu0 %v2752
    %v2754 = vpop.xlane.xlu0 %2753
    %v2755 = vrcp.pop %v2754
    %v2756 = vmul.f32 %v2752, %v2755
    %2757 = vst [vmem:[#allocation11] sm:$0xff] %v2756
    // Predicated region
    $region42: #{tpu_custom_call.1} parent=1 // pred_check
      _
    $region43: #{tpu_custom_call.1} parent=1 // pred_check_branch
      %2759 = sbr.rel (0) target = $region45
    $region44: #{tpu_custom_call.1} parent=1 // pred_region
      %s2761 = ssub.s32 128, 128
      %2762 = vsyncadd [#allocation4], %s2761
      %s2764 = sshll.u32 [#allocation11], 4
      %s2765 = int_to_ptr.vmem [resolvable:$true] %s2764
      %2767 = dma.vmem_to_hbm [thread:$0]  %s2765, 128, %s5, [#allocation4]
    $region45: #{tpu_custom_call.1} parent=1 // pred_fallthru
      _
    // Predicated region
    $region46: #{tpu_custom_call.1} parent=1 // pred_check
      _
    $region47: #{tpu_custom_call.1} parent=1 // pred_check_branch
      %2769 = sbr.rel (0) target = $region49
    $region48: #{tpu_custom_call.1} parent=1 // pred_region
      %2770 = dma.done [#allocation4], 128
    $region49: #{tpu_custom_call.1} parent=1 // pred_fallthru
      _
    %2771 = vsyncpa [#allocation3], 1
    %2772 = vsyncpa [#allocation6], 1
    %2773 = vsyncpa [#allocation9], 1
    %2774 = vsyncpa [#allocation4], 1

</llo_original>
